<compile_context>
chip_gen: v7x
topology: tpu7x:2x2x1
jax: 0.10.0
libtpu: 0.0.40
codegen_flags: <defaults>
</compile_context>

<pallas_src>
import math
import functools

import jax
import jax.numpy as jnp
from jax.experimental import pallas as pl
from jax.experimental.pallas import tpu as pltpu

_SQRT_HALF = math.sqrt(0.5)


def _round_up(x, m):
    return (x + m - 1) // m * m


# ----------------------------- fused kernel ---------------------------------

def _generator_kernel(x_ref, wfirst_ref, wconv_ref, wso_ref,
                      w1_ref, b1_ref, w2_ref, b2_ref,
                      y_ref,
                      xst_ref, skip_ref,
                      *, K, T, dilations, xstart, C_skip, skip_scale):
    """One (batch, stack) grid step of the fused WaveNet generator."""
    # TODO(synk): F.dropout(p=0.05) is eval-mode identity here (training-mode
    # dropout is stochastic and not reproducible against the torch reference).
    s = pl.program_id(1)
    center = (K - 1) // 2
    wdt = wconv_ref.dtype
    c_half = wconv_ref.shape[2] // 2

    @pl.when(s == 0)
    def _init():
        # first_conv: Conv1d(C_in, C_res, K, padding=center, bias=False).
        # Input arrives pre-padded by `center` along time, so tap k is a plain
        # static slice.  C_in is tiny, so K small matmuls are fine here.
        x_in = x_ref[0]                                          # (C_in, T+K-1)
        acc = jnp.zeros((xst_ref.shape[0], T), jnp.float32)
        for k in range(K):
            acc = acc + jnp.dot(wfirst_ref[k],
                                x_in[:, k:k + T].astype(wfirst_ref.dtype),
                                preferred_element_type=jnp.float32)
        xst_ref[...] = jnp.zeros(xst_ref.shape, jnp.float32)     # zero halo once
        xst_ref[:, xstart:xstart + T] = acc
        skip_ref[...] = jnp.zeros(skip_ref.shape, jnp.float32)

    # Residual layers of this stack (static dilations 3**j, fully unrolled).
    for j, d in enumerate(dilations):
        # im2col: K time-shifted views of x concatenated along the contraction
        # dim -> one deep MXU matmul per layer.
        taps = [xst_ref[:, xstart + (k - center) * d:
                        xstart + (k - center) * d + T] for k in range(K)]
        xk = jnp.concatenate(taps, axis=0).astype(wdt)           # (K*C_res, T)
        gates = jnp.dot(wconv_ref[0, j], xk,
                        preferred_element_type=jnp.float32)      # (C_gate, T)
        # GLU: channels [0, half) -> tanh, [half, 2*half) -> sigmoid.
        g = jnp.tanh(gates[:c_half]) * jax.nn.sigmoid(gates[c_half:])
        # Fused skip/out 1x1 convs: rows [0, C_skip) -> skip, rest -> out.
        so = jnp.dot(wso_ref[0, j], g.astype(wdt),
                     preferred_element_type=jnp.float32)         # (C_skip+C_res, T)
        skip_ref[...] = skip_ref[...] + so[:C_skip]
        xst_ref[:, xstart:xstart + T] = (
            (so[C_skip:] + xst_ref[:, xstart:xstart + T]) * _SQRT_HALF)

    @pl.when(s == pl.num_programs(1) - 1)
    def _head():
        # skips * sqrt(1/L) -> ReLU -> 1x1(+b) -> ReLU -> 1x1(+b)
        h = jnp.maximum(skip_ref[...] * skip_scale, 0.0)
        h = jnp.dot(w1_ref[...], h.astype(w1_ref.dtype),
                    preferred_element_type=jnp.float32) + b1_ref[...]
        h = jnp.maximum(h, 0.0)
        y = jnp.dot(w2_ref[...], h.astype(w2_ref.dtype),
                    preferred_element_type=jnp.float32) + b2_ref[...]
        y_ref[0] = y.astype(y_ref.dtype)


# ----------------------------- wrapper ---------------------------------------

def generator_pallas(x, wfirst, wconv, wso, w1, b1, w2, b2, *,
                     num_layers, kernel_size):
    """Fused WaveNet generator forward.

    x:      (B, C_in, T)
    wfirst: (K, C_res, C_in)                      first conv, per-tap
    wconv:  (S, L/S, C_gate, K*C_res)             gate convs, taps fused
    wso:    (S, L/S, C_skip + C_res, C_gate//2)   fused skip+out 1x1 convs
    w1, b1, w2, b2: head 1x1 convs (with bias)
    """
    B, C_in, T = x.shape
    K = kernel_size
    S, LPS, C_gate, KC = wconv.shape
    C_res = KC // K
    C_half = C_gate // 2
    C_skip = w1.shape[0]
    C_out = w2.shape[0]
    assert S * LPS == num_layers

    dilations = tuple(3 ** j for j in range(LPS))
    maxpad = (K - 1) // 2 * max(dilations)
    xstart = _round_up(maxpad, 128)          # lane-aligned x offset in scratch
    pad_first = (K - 1) // 2                 # first_conv "same" padding (once, tiny)
    x_pad = jnp.pad(x, ((0, 0), (0, 0), (pad_first, pad_first)))
    Tp = T + 2 * pad_first

    kern = functools.partial(
        _generator_kernel, K=K, T=T, dilations=dilations, xstart=xstart,
        C_skip=C_skip, skip_scale=math.sqrt(1.0 / num_layers))

    flops = 2 * B * T * (K * C_in * C_res
                         + num_layers * (K * C_res * C_gate
                                         + C_half * (C_skip + C_res))
                         + C_skip * C_skip + C_skip * C_out)
    transcendentals = B * num_layers * T * C_gate
    bytes_accessed = 4 * (x.size + B * C_out * T
                          + B * (wconv.size + wso.size)
                          + wfirst.size + w1.size + b1.size + w2.size + b2.size)

    return pl.pallas_call(
        kern,
        out_shape=jax.ShapeDtypeStruct((B, C_out, T), x.dtype),
        grid=(B, S),
        in_specs=[
            pl.BlockSpec((1, C_in, Tp), lambda b, s: (b, 0, 0)),
            pl.BlockSpec((K, C_res, C_in), lambda b, s: (0, 0, 0)),
            pl.BlockSpec((1, LPS, C_gate, K * C_res), lambda b, s: (s, 0, 0, 0)),
            pl.BlockSpec((1, LPS, C_skip + C_res, C_half),
                         lambda b, s: (s, 0, 0, 0)),
            pl.BlockSpec((C_skip, C_skip), lambda b, s: (0, 0)),
            pl.BlockSpec((C_skip, 1), lambda b, s: (0, 0)),
            pl.BlockSpec((C_out, C_skip), lambda b, s: (0, 0)),
            pl.BlockSpec((C_out, 1), lambda b, s: (0, 0)),
        ],
        out_specs=pl.BlockSpec((1, C_out, T), lambda b, s: (b, 0, 0)),
        scratch_shapes=[
            pltpu.VMEM((C_res, xstart + T + maxpad), jnp.float32),  # padded x
            pltpu.VMEM((C_skip, T), jnp.float32),                   # skip accum
        ],
        compiler_params=pltpu.CompilerParams(
            dimension_semantics=("parallel", "arbitrary"),
            vmem_limit_bytes=64 * 1024 * 1024),
        cost_estimate=pl.CostEstimate(flops=flops,
                                      transcendentals=transcendentals,
                                      bytes_accessed=bytes_accessed),
    )(x_pad, wfirst, wconv, wso, w1, b1, w2, b2)


# ----------------------------- parameters & forward -------------------------

def init_generator_params(key, *, in_channels, out_channels=1, num_layers=16,
                          num_stacks=2, kernel_size=3, residual_channels=128,
                          gate_channels=128, skip_out_channels=128):
    assert num_layers % num_stacks == 0
    lps = num_layers // num_stacks
    K = kernel_size
    C_res, C_gate, C_skip = residual_channels, gate_channels, skip_out_channels
    C_half = C_gate // 2
    keys = iter(jax.random.split(key, 1 + 3 * num_layers + 4))

    def w(shape, fan_in):
        return jax.random.normal(next(keys), shape, jnp.float32) / math.sqrt(fan_in)

    params = {}
    # first_conv: Conv1d(in, res, 3, padding=1, bias=False); tap k <-> W[:, :, k]
    params["first_conv_w"] = w((3, C_res, in_channels), in_channels * 3)

    wconv_l, wso_l = [], []
    for _ in range(num_layers):
        wc = w((K, C_gate, C_res), C_res * K)       # dilated gate conv (no bias)
        wskip = w((C_skip, C_half), C_half)         # conv1x1_skip (no bias)
        wout = w((C_res, C_half), C_half)           # conv1x1_out  (no bias)
        # fuse taps along the contraction dim: (C_gate, K*C_res)
        wconv_l.append(jnp.concatenate([wc[k] for k in range(K)], axis=1))
        # fuse skip + out 1x1 convs row-wise: (C_skip + C_res, C_half)
        wso_l.append(jnp.concatenate([wskip, wout], axis=0))
    params["wconv"] = jnp.stack(wconv_l).reshape(num_stacks, lps,
                                                 C_gate, K * C_res)
    params["wso"] = jnp.stack(wso_l).reshape(num_stacks, lps,
                                             C_skip + C_res, C_half)

    # last_conv_layers: ReLU, Conv1d(skip, skip, 1, bias=True),
    #                   ReLU, Conv1d(skip, out, 1, bias=True)
    params["head_w1"] = w((C_skip, C_skip), C_skip)
    params["head_b1"] = w((C_skip, 1), C_skip)
    params["head_w2"] = w((out_channels, C_skip), C_skip)
    params["head_b2"] = w((out_channels, 1), C_skip)
    params["num_layers"] = num_layers
    params["num_stacks"] = num_stacks
    params["kernel_size"] = kernel_size
    return params


def generator_forward(params, x):
    """x: (B, in_channels, T)  ->  ((B, out_channels, T), None)."""
    y = generator_pallas(
        x, params["first_conv_w"], params["wconv"], params["wso"],
        params["head_w1"], params["head_b1"], params["head_w2"],
        params["head_b2"],
        num_layers=params["num_layers"], kernel_size=params["kernel_size"])
    return y, None


# ----------------------------- pure-JAX reference ----------------------------

def _conv1d_ref(x, w_taps, dilation):
    """x: (B, C_in, T), w_taps: (K, C_out, C_in); 'same' dilated conv, no bias."""
    K = w_taps.shape[0]
    pad = (K - 1) // 2 * dilation
    T = x.shape[-1]
    xpad = jnp.pad(x, ((0, 0), (0, 0), (pad, pad)))
    out = 0.0
    for k in range(K):
        out = out + jnp.einsum('oc,bct->bot', w_taps[k],
                               xpad[:, :, k * dilation:k * dilation + T])
    return out


def generator_reference(params, x):
    K = params["kernel_size"]
    L = params["num_layers"]
    S = params["num_stacks"]
    LPS = L // S
    wfirst = params["first_conv_w"]
    C_res = wfirst.shape[1]
    C_skip = params["head_w1"].shape[0]
    wconv = params["wconv"].reshape((L,) + params["wconv"].shape[2:])
    wso = params["wso"].reshape((L,) + params["wso"].shape[2:])

    x = _conv1d_ref(x, wfirst, 1)
    skips = 0.0
    for n in range(L):
        d = 3 ** (n % LPS)
        wc_taps = jnp.stack([wconv[n][:, k * C_res:(k + 1) * C_res]
                             for k in range(K)])
        gates = _conv1d_ref(x, wc_taps, d)
        half = gates.shape[1] // 2
        g = jnp.tanh(gates[:, :half]) * jax.nn.sigmoid(gates[:, half:])
        s_ = jnp.einsum('oc,bct->bot', wso[n][:C_skip], g)
        out = jnp.einsum('oc,bct->bot', wso[n][C_skip:], g)
        x = (out + x) * math.sqrt(0.5)
        skips = skips + s_
    skips = skips * math.sqrt(1.0 / L)
    h = jnp.maximum(skips, 0.0)
    h = jnp.einsum('oc,bct->bot', params["head_w1"], h) + params["head_b1"][None]
    h = jnp.maximum(h, 0.0)
    y = jnp.einsum('oc,bct->bot', params["head_w2"], h) + params["head_b2"][None]
    return y


# ----------------------------- main ------------------------------------------

if __name__ == "__main__":
    key = jax.random.PRNGKey(0)
    kp, kx = jax.random.split(key)

    # Small shapes consistent with the module's forward.
    B, C_in, T = 2, 4, 128
    params = init_generator_params(
        kp, in_channels=C_in, out_channels=1, num_layers=4, num_stacks=2,
        kernel_size=3, residual_channels=32, gate_channels=32,
        skip_out_channels=32)

    x = jax.random.normal(kx, (B, C_in, T), jnp.float32)
    y, aux = generator_forward(params, x)
    y = jax.block_until_ready(y)

    assert y.shape == (B, 1, T)
    assert aux is None
    assert bool(jnp.all(jnp.isfinite(y)))

    y_ref = generator_reference(params, x)
    assert bool(jnp.allclose(y, y_ref, atol=1e-3, rtol=1e-3)), \
        float(jnp.max(jnp.abs(y - y_ref)))
    print("KERNEL_OK")
</pallas_src>

<mosaic_0001>
module attributes {stable_mosaic.version = 11 : i64} {
  func.func @_generator_kernel(%arg0: i32, %arg1: i32, %arg2: memref<1x4x130xf32, #tpu.memory_space<vmem>>, %arg3: memref<3x32x4xf32, #tpu.memory_space<vmem>>, %arg4: memref<1x2x32x96xf32, #tpu.memory_space<vmem>>, %arg5: memref<1x2x64x16xf32, #tpu.memory_space<vmem>>, %arg6: memref<32x32xf32, #tpu.memory_space<vmem>>, %arg7: memref<32x1xf32, #tpu.memory_space<vmem>>, %arg8: memref<1x32xf32, #tpu.memory_space<vmem>>, %arg9: memref<1x1xf32, #tpu.memory_space<vmem>>, %arg10: memref<1x1x128xf32, #tpu.memory_space<vmem>>, %arg11: memref<32x259xf32, #tpu.memory_space<vmem>>, %arg12: memref<32x128xf32, #tpu.memory_space<vmem>>) attributes {dimension_semantics = [#tpu.dimension_semantics<parallel>, #tpu.dimension_semantics<arbitrary>], iteration_bounds = array<i64: 2, 2>, scalar_prefetch = 0 : i64, scratch_operands = 2 : i64, tpu.core_type = #tpu.core_type<tc>, window_params = [{transform_indices = @transform_0, window_bounds = array<i64: 1, 4, 130>}, {pipeline_mode = #tpu.pipeline_mode<synchronous>, transform_indices = @transform_1, window_bounds = array<i64: 3, 32, 4>}, {transform_indices = @transform_2, window_bounds = array<i64: 1, 2, 32, 96>}, {transform_indices = @transform_3, window_bounds = array<i64: 1, 2, 64, 16>}, {pipeline_mode = #tpu.pipeline_mode<synchronous>, transform_indices = @transform_4, window_bounds = array<i64: 32, 32>}, {pipeline_mode = #tpu.pipeline_mode<synchronous>, transform_indices = @transform_5, window_bounds = array<i64: 32, 1>}, {pipeline_mode = #tpu.pipeline_mode<synchronous>, transform_indices = @transform_6, window_bounds = array<i64: 1, 32>}, {pipeline_mode = #tpu.pipeline_mode<synchronous>, transform_indices = @transform_7, window_bounds = array<i64: 1, 1>}, {transform_indices = @transform_8, window_bounds = array<i64: 1, 1, 128>}]} {
    %c0_i32 = arith.constant 0 : i32
    %0 = arith.cmpi eq, %arg1, %c0_i32 : i32
    %1 = arith.extui %0 : i1 to i32
    %c0_i32_0 = arith.constant 0 : i32
    %2 = arith.cmpi ne, %1, %c0_i32_0 : i32
    scf.if %2 {
      %c0_46 = arith.constant 0 : index
      %c0_47 = arith.constant 0 : index
      %c0_48 = arith.constant 0 : index
      %64 = vector.load %arg2[%c0_46, %c0_47, %c0_48] : memref<1x4x130xf32, #tpu.memory_space<vmem>>, vector<1x4x130xf32>
      %65 = vector.shape_cast %64 : vector<1x4x130xf32> to vector<4x130xf32>
      %cst_49 = arith.constant 0.000000e+00 : f32
      %66 = vector.broadcast %cst_49 : f32 to vector<32x128xf32>
      %c0_50 = arith.constant 0 : index
      %c0_51 = arith.constant 0 : index
      %c0_52 = arith.constant 0 : index
      %67 = vector.load %arg3[%c0_50, %c0_51, %c0_52] : memref<3x32x4xf32, #tpu.memory_space<vmem>>, vector<1x32x4xf32>
      %68 = vector.shape_cast %67 : vector<1x32x4xf32> to vector<32x4xf32>
      %69 = vector.extract_strided_slice %65 {offsets = [0, 0], sizes = [4, 128], strides = [1, 1]} : vector<4x130xf32> to vector<4x128xf32>
      %cst_53 = arith.constant dense<0.000000e+00> : vector<32x128xf32>
      %70 = tpu.matmul %68, %69, %cst_53 {dimension_numbers = #tpu.dot_dimension_numbers<[1], [0], [0], [1], [0, 0, 1, 1], [], []>} : vector<32x4xf32>, vector<4x128xf32>, vector<32x128xf32> -> vector<32x128xf32>
      %71 = arith.addf %66, %70 : vector<32x128xf32>
      %c1_54 = arith.constant 1 : index
      %c0_55 = arith.constant 0 : index
      %c0_56 = arith.constant 0 : index
      %72 = vector.load %arg3[%c1_54, %c0_55, %c0_56] : memref<3x32x4xf32, #tpu.memory_space<vmem>>, vector<1x32x4xf32>
      %73 = vector.shape_cast %72 : vector<1x32x4xf32> to vector<32x4xf32>
      %74 = vector.extract_strided_slice %65 {offsets = [0, 1], sizes = [4, 128], strides = [1, 1]} : vector<4x130xf32> to vector<4x128xf32>
      %cst_57 = arith.constant dense<0.000000e+00> : vector<32x128xf32>
      %75 = tpu.matmul %73, %74, %cst_57 {dimension_numbers = #tpu.dot_dimension_numbers<[1], [0], [0], [1], [0, 0, 1, 1], [], []>} : vector<32x4xf32>, vector<4x128xf32>, vector<32x128xf32> -> vector<32x128xf32>
      %76 = arith.addf %71, %75 : vector<32x128xf32>
      %c2 = arith.constant 2 : index
      %c0_58 = arith.constant 0 : index
      %c0_59 = arith.constant 0 : index
      %77 = vector.load %arg3[%c2, %c0_58, %c0_59] : memref<3x32x4xf32, #tpu.memory_space<vmem>>, vector<1x32x4xf32>
      %78 = vector.shape_cast %77 : vector<1x32x4xf32> to vector<32x4xf32>
      %79 = vector.extract_strided_slice %65 {offsets = [0, 2], sizes = [4, 128], strides = [1, 1]} : vector<4x130xf32> to vector<4x128xf32>
      %cst_60 = arith.constant dense<0.000000e+00> : vector<32x128xf32>
      %80 = tpu.matmul %78, %79, %cst_60 {dimension_numbers = #tpu.dot_dimension_numbers<[1], [0], [0], [1], [0, 0, 1, 1], [], []>} : vector<32x4xf32>, vector<4x128xf32>, vector<32x128xf32> -> vector<32x128xf32>
      %81 = arith.addf %76, %80 : vector<32x128xf32>
      %cst_61 = arith.constant 0.000000e+00 : f32
      %82 = vector.broadcast %cst_61 : f32 to vector<32x259xf32>
      %c0_62 = arith.constant 0 : index
      %c0_63 = arith.constant 0 : index
      %83 = vector.load %arg11[%c0_62, %c0_63] : memref<32x259xf32, #tpu.memory_space<vmem>>, vector<32x259xf32>
      tpu.vector_store %arg11[%c0_62, %c0_63], %82 {strides = array<i32>} : memref<32x259xf32, #tpu.memory_space<vmem>>, vector<32x259xf32>,
      %c0_64 = arith.constant 0 : index
      %c128_65 = arith.constant 128 : index
      %84 = vector.load %arg11[%c0_64, %c128_65] : memref<32x259xf32, #tpu.memory_space<vmem>>, vector<32x128xf32>
      tpu.vector_store %arg11[%c0_64, %c128_65], %81 {strides = array<i32>} : memref<32x259xf32, #tpu.memory_space<vmem>>, vector<32x128xf32>,
      %cst_66 = arith.constant 0.000000e+00 : f32
      %85 = vector.broadcast %cst_66 : f32 to vector<32x128xf32>
      %c0_67 = arith.constant 0 : index
      %c0_68 = arith.constant 0 : index
      %86 = vector.load %arg12[%c0_67, %c0_68] : memref<32x128xf32, #tpu.memory_space<vmem>>, vector<32x128xf32>
      tpu.vector_store %arg12[%c0_67, %c0_68], %85 {strides = array<i32>} : memref<32x128xf32, #tpu.memory_space<vmem>>, vector<32x128xf32>,
    } else {
    }
    %c0 = arith.constant 0 : index
    %c127 = arith.constant 127 : index
    %3 = vector.load %arg11[%c0, %c127] : memref<32x259xf32, #tpu.memory_space<vmem>>, vector<32x128xf32>
    %c0_1 = arith.constant 0 : index
    %c128 = arith.constant 128 : index
    %4 = vector.load %arg11[%c0_1, %c128] : memref<32x259xf32, #tpu.memory_space<vmem>>, vector<32x128xf32>
    %c0_2 = arith.constant 0 : index
    %c129 = arith.constant 129 : index
    %5 = vector.load %arg11[%c0_2, %c129] : memref<32x259xf32, #tpu.memory_space<vmem>>, vector<32x128xf32>
    %6 = tpu.concatenate %3, %4, %5 in 0 : vector<32x128xf32>, vector<32x128xf32>, vector<32x128xf32> -> vector<96x128xf32>
    %c0_3 = arith.constant 0 : index
    %c0_4 = arith.constant 0 : index
    %c0_5 = arith.constant 0 : index
    %c0_6 = arith.constant 0 : index
    %7 = vector.load %arg4[%c0_3, %c0_4, %c0_5, %c0_6] : memref<1x2x32x96xf32, #tpu.memory_space<vmem>>, vector<1x1x32x96xf32>
    %8 = vector.shape_cast %7 : vector<1x1x32x96xf32> to vector<32x96xf32>
    %cst = arith.constant dense<0.000000e+00> : vector<32x128xf32>
    %9 = tpu.matmul %8, %6, %cst {dimension_numbers = #tpu.dot_dimension_numbers<[1], [0], [0], [1], [0, 0, 1, 1], [], []>} : vector<32x96xf32>, vector<96x128xf32>, vector<32x128xf32> -> vector<32x128xf32>
    %10 = vector.extract_strided_slice %9 {offsets = [0, 0], sizes = [16, 128], strides = [1, 1]} : vector<32x128xf32> to vector<16x128xf32>
    %11 = math.tanh %10 : vector<16x128xf32>
    %12 = vector.extract_strided_slice %9 {offsets = [16, 0], sizes = [16, 128], strides = [1, 1]} : vector<32x128xf32> to vector<16x128xf32>
    %13 = arith.negf %12 : vector<16x128xf32>
    %14 = math.exp %13 : vector<16x128xf32>
    %cst_7 = arith.constant 1.000000e+00 : f32
    %15 = vector.broadcast %cst_7 : f32 to vector<16x128xf32>
    %16 = arith.addf %15, %14 : vector<16x128xf32>
    %17 = arith.divf %15, %16 : vector<16x128xf32>
    %18 = arith.mulf %11, %17 : vector<16x128xf32>
    %c0_8 = arith.constant 0 : index
    %c0_9 = arith.constant 0 : index
    %c0_10 = arith.constant 0 : index
    %c0_11 = arith.constant 0 : index
    %19 = vector.load %arg5[%c0_8, %c0_9, %c0_10, %c0_11] : memref<1x2x64x16xf32, #tpu.memory_space<vmem>>, vector<1x1x64x16xf32>
    %20 = vector.shape_cast %19 : vector<1x1x64x16xf32> to vector<64x16xf32>
    %cst_12 = arith.constant dense<0.000000e+00> : vector<64x128xf32>
    %21 = tpu.matmul %20, %18, %cst_12 {dimension_numbers = #tpu.dot_dimension_numbers<[1], [0], [0], [1], [0, 0, 1, 1], [], []>} : vector<64x16xf32>, vector<16x128xf32>, vector<64x128xf32> -> vector<64x128xf32>
    %c0_13 = arith.constant 0 : index
    %c0_14 = arith.constant 0 : index
    %22 = vector.load %arg12[%c0_13, %c0_14] : memref<32x128xf32, #tpu.memory_space<vmem>>, vector<32x128xf32>
    %23 = vector.extract_strided_slice %21 {offsets = [0, 0], sizes = [32, 128], strides = [1, 1]} : vector<64x128xf32> to vector<32x128xf32>
    %24 = arith.addf %22, %23 : vector<32x128xf32>
    %c0_15 = arith.constant 0 : index
    %c0_16 = arith.constant 0 : index
    %25 = vector.load %arg12[%c0_15, %c0_16] : memref<32x128xf32, #tpu.memory_space<vmem>>, vector<32x128xf32>
    tpu.vector_store %arg12[%c0_15, %c0_16], %24 {strides = array<i32>} : memref<32x128xf32, #tpu.memory_space<vmem>>, vector<32x128xf32>,
    %26 = vector.extract_strided_slice %21 {offsets = [32, 0], sizes = [32, 128], strides = [1, 1]} : vector<64x128xf32> to vector<32x128xf32>
    %c0_17 = arith.constant 0 : index
    %c128_18 = arith.constant 128 : index
    %27 = vector.load %arg11[%c0_17, %c128_18] : memref<32x259xf32, #tpu.memory_space<vmem>>, vector<32x128xf32>
    %28 = arith.addf %26, %27 : vector<32x128xf32>
    %cst_19 = arith.constant 0.707106769 : f32
    %29 = vector.broadcast %cst_19 : f32 to vector<32x128xf32>
    %30 = arith.mulf %28, %29 : vector<32x128xf32>
    %c0_20 = arith.constant 0 : index
    %c128_21 = arith.constant 128 : index
    %31 = vector.load %arg11[%c0_20, %c128_21] : memref<32x259xf32, #tpu.memory_space<vmem>>, vector<32x128xf32>
    tpu.vector_store %arg11[%c0_20, %c128_21], %30 {strides = array<i32>} : memref<32x259xf32, #tpu.memory_space<vmem>>, vector<32x128xf32>,
    %c0_22 = arith.constant 0 : index
    %c125 = arith.constant 125 : index
    %32 = vector.load %arg11[%c0_22, %c125] : memref<32x259xf32, #tpu.memory_space<vmem>>, vector<32x128xf32>
    %c0_23 = arith.constant 0 : index
    %c128_24 = arith.constant 128 : index
    %33 = vector.load %arg11[%c0_23, %c128_24] : memref<32x259xf32, #tpu.memory_space<vmem>>, vector<32x128xf32>
    %c0_25 = arith.constant 0 : index
    %c131 = arith.constant 131 : index
    %34 = vector.load %arg11[%c0_25, %c131] : memref<32x259xf32, #tpu.memory_space<vmem>>, vector<32x128xf32>
    %35 = tpu.concatenate %32, %33, %34 in 0 : vector<32x128xf32>, vector<32x128xf32>, vector<32x128xf32> -> vector<96x128xf32>
    %c0_26 = arith.constant 0 : index
    %c1 = arith.constant 1 : index
    %c0_27 = arith.constant 0 : index
    %c0_28 = arith.constant 0 : index
    %36 = vector.load %arg4[%c0_26, %c1, %c0_27, %c0_28] : memref<1x2x32x96xf32, #tpu.memory_space<vmem>>, vector<1x1x32x96xf32>
    %37 = vector.shape_cast %36 : vector<1x1x32x96xf32> to vector<32x96xf32>
    %cst_29 = arith.constant dense<0.000000e+00> : vector<32x128xf32>
    %38 = tpu.matmul %37, %35, %cst_29 {dimension_numbers = #tpu.dot_dimension_numbers<[1], [0], [0], [1], [0, 0, 1, 1], [], []>} : vector<32x96xf32>, vector<96x128xf32>, vector<32x128xf32> -> vector<32x128xf32>
    %39 = vector.extract_strided_slice %38 {offsets = [0, 0], sizes = [16, 128], strides = [1, 1]} : vector<32x128xf32> to vector<16x128xf32>
    %40 = math.tanh %39 : vector<16x128xf32>
    %41 = vector.extract_strided_slice %38 {offsets = [16, 0], sizes = [16, 128], strides = [1, 1]} : vector<32x128xf32> to vector<16x128xf32>
    %42 = arith.negf %41 : vector<16x128xf32>
    %43 = math.exp %42 : vector<16x128xf32>
    %cst_30 = arith.constant 1.000000e+00 : f32
    %44 = vector.broadcast %cst_30 : f32 to vector<16x128xf32>
    %45 = arith.addf %44, %43 : vector<16x128xf32>
    %46 = arith.divf %44, %45 : vector<16x128xf32>
    %47 = arith.mulf %40, %46 : vector<16x128xf32>
    %c0_31 = arith.constant 0 : index
    %c1_32 = arith.constant 1 : index
    %c0_33 = arith.constant 0 : index
    %c0_34 = arith.constant 0 : index
    %48 = vector.load %arg5[%c0_31, %c1_32, %c0_33, %c0_34] : memref<1x2x64x16xf32, #tpu.memory_space<vmem>>, vector<1x1x64x16xf32>
    %49 = vector.shape_cast %48 : vector<1x1x64x16xf32> to vector<64x16xf32>
    %cst_35 = arith.constant dense<0.000000e+00> : vector<64x128xf32>
    %50 = tpu.matmul %49, %47, %cst_35 {dimension_numbers = #tpu.dot_dimension_numbers<[1], [0], [0], [1], [0, 0, 1, 1], [], []>} : vector<64x16xf32>, vector<16x128xf32>, vector<64x128xf32> -> vector<64x128xf32>
    %c0_36 = arith.constant 0 : index
    %c0_37 = arith.constant 0 : index
    %51 = vector.load %arg12[%c0_36, %c0_37] : memref<32x128xf32, #tpu.memory_space<vmem>>, vector<32x128xf32>
    %52 = vector.extract_strided_slice %50 {offsets = [0, 0], sizes = [32, 128], strides = [1, 1]} : vector<64x128xf32> to vector<32x128xf32>
    %53 = arith.addf %51, %52 : vector<32x128xf32>
    %c0_38 = arith.constant 0 : index
    %c0_39 = arith.constant 0 : index
    %54 = vector.load %arg12[%c0_38, %c0_39] : memref<32x128xf32, #tpu.memory_space<vmem>>, vector<32x128xf32>
    tpu.vector_store %arg12[%c0_38, %c0_39], %53 {strides = array<i32>} : memref<32x128xf32, #tpu.memory_space<vmem>>, vector<32x128xf32>,
    %55 = vector.extract_strided_slice %50 {offsets = [32, 0], sizes = [32, 128], strides = [1, 1]} : vector<64x128xf32> to vector<32x128xf32>
    %c0_40 = arith.constant 0 : index
    %c128_41 = arith.constant 128 : index
    %56 = vector.load %arg11[%c0_40, %c128_41] : memref<32x259xf32, #tpu.memory_space<vmem>>, vector<32x128xf32>
    %57 = arith.addf %55, %56 : vector<32x128xf32>
    %cst_42 = arith.constant 0.707106769 : f32
    %58 = vector.broadcast %cst_42 : f32 to vector<32x128xf32>
    %59 = arith.mulf %57, %58 : vector<32x128xf32>
    %c0_43 = arith.constant 0 : index
    %c128_44 = arith.constant 128 : index
    %60 = vector.load %arg11[%c0_43, %c128_44] : memref<32x259xf32, #tpu.memory_space<vmem>>, vector<32x128xf32>
    tpu.vector_store %arg11[%c0_43, %c128_44], %59 {strides = array<i32>} : memref<32x259xf32, #tpu.memory_space<vmem>>, vector<32x128xf32>,
    %c1_i32 = arith.constant 1 : i32
    %61 = arith.cmpi eq, %arg1, %c1_i32 : i32
    %62 = arith.extui %61 : i1 to i32
    %c0_i32_45 = arith.constant 0 : i32
    %63 = arith.cmpi ne, %62, %c0_i32_45 : i32
    scf.if %63 {
      %c0_46 = arith.constant 0 : index
      %c0_47 = arith.constant 0 : index
      %64 = vector.load %arg12[%c0_46, %c0_47] : memref<32x128xf32, #tpu.memory_space<vmem>>, vector<32x128xf32>
      %cst_48 = arith.constant 5.000000e-01 : f32
      %65 = vector.broadcast %cst_48 : f32 to vector<32x128xf32>
      %66 = arith.mulf %64, %65 : vector<32x128xf32>
      %cst_49 = arith.constant 0.000000e+00 : f32
      %67 = vector.broadcast %cst_49 : f32 to vector<32x128xf32>
      %68 = arith.maximumf %66, %67 : vector<32x128xf32>
      %c0_50 = arith.constant 0 : index
      %c0_51 = arith.constant 0 : index
      %69 = vector.load %arg6[%c0_50, %c0_51] : memref<32x32xf32, #tpu.memory_space<vmem>>, vector<32x32xf32>
      %cst_52 = arith.constant dense<0.000000e+00> : vector<32x128xf32>
      %70 = tpu.matmul %69, %68, %cst_52 {dimension_numbers = #tpu.dot_dimension_numbers<[1], [0], [0], [1], [0, 0, 1, 1], [], []>} : vector<32x32xf32>, vector<32x128xf32>, vector<32x128xf32> -> vector<32x128xf32>
      %c0_53 = arith.constant 0 : index
      %c0_54 = arith.constant 0 : index
      %71 = vector.load %arg7[%c0_53, %c0_54] : memref<32x1xf32, #tpu.memory_space<vmem>>, vector<32x1xf32>
      %72 = vector.broadcast %71 : vector<32x1xf32> to vector<32x128xf32>
      %73 = arith.addf %70, %72 : vector<32x128xf32>
      %cst_55 = arith.constant 0.000000e+00 : f32
      %74 = vector.broadcast %cst_55 : f32 to vector<32x128xf32>
      %75 = arith.maximumf %73, %74 : vector<32x128xf32>
      %c0_56 = arith.constant 0 : index
      %c0_57 = arith.constant 0 : index
      %76 = vector.load %arg8[%c0_56, %c0_57] : memref<1x32xf32, #tpu.memory_space<vmem>>, vector<1x32xf32>
      %cst_58 = arith.constant dense<0.000000e+00> : vector<1x128xf32>
      %77 = tpu.matmul %76, %75, %cst_58 {dimension_numbers = #tpu.dot_dimension_numbers<[1], [0], [0], [1], [0, 0, 1, 1], [], []>} : vector<1x32xf32>, vector<32x128xf32>, vector<1x128xf32> -> vector<1x128xf32>
      %c0_59 = arith.constant 0 : index
      %c0_60 = arith.constant 0 : index
      %78 = vector.load %arg9[%c0_59, %c0_60] : memref<1x1xf32, #tpu.memory_space<vmem>>, vector<1x1xf32>
      %79 = vector.broadcast %78 : vector<1x1xf32> to vector<1x128xf32>
      %80 = arith.addf %77, %79 : vector<1x128xf32>
      %c0_61 = arith.constant 0 : index
      %c0_62 = arith.constant 0 : index
      %c0_63 = arith.constant 0 : index
      %81 = vector.load %arg10[%c0_61, %c0_62, %c0_63] : memref<1x1x128xf32, #tpu.memory_space<vmem>>, vector<1x1x128xf32>
      %82 = vector.shape_cast %81 : vector<1x1x128xf32> to vector<1x128xf32>
      %83 = vector.shape_cast %80 : vector<1x128xf32> to vector<1x1x128xf32>
      tpu.vector_store %arg10[%c0_61, %c0_62, %c0_63], %83 {strides = array<i32>} : memref<1x1x128xf32, #tpu.memory_space<vmem>>, vector<1x1x128xf32>,
    } else {
    }
    return
  }
  func.func @transform_0(%arg0: i32, %arg1: i32) -> (i32, i32, i32) {
    %c0_i32 = arith.constant 0 : i32
    %c0_i32_0 = arith.constant 0 : i32
    %c0_i32_1 = arith.constant 0 : i32
    return %arg0, %c0_i32, %c0_i32_0 : i32, i32, i32
  }
  func.func @transform_1(%arg0: i32, %arg1: i32) -> (i32, i32, i32) {
    %c0_i32 = arith.constant 0 : i32
    %c0_i32_0 = arith.constant 0 : i32
    %c0_i32_1 = arith.constant 0 : i32
    %c0_i32_2 = arith.constant 0 : i32
    return %c0_i32, %c0_i32_0, %c0_i32_1 : i32, i32, i32
  }
  func.func @transform_2(%arg0: i32, %arg1: i32) -> (i32, i32, i32, i32) {
    %c0_i32 = arith.constant 0 : i32
    %c0_i32_0 = arith.constant 0 : i32
    %c0_i32_1 = arith.constant 0 : i32
    %c0_i32_2 = arith.constant 0 : i32
    return %arg1, %c0_i32, %c0_i32_0, %c0_i32_1 : i32, i32, i32, i32
  }
  func.func @transform_3(%arg0: i32, %arg1: i32) -> (i32, i32, i32, i32) {
    %c0_i32 = arith.constant 0 : i32
    %c0_i32_0 = arith.constant 0 : i32
    %c0_i32_1 = arith.constant 0 : i32
    %c0_i32_2 = arith.constant 0 : i32
    return %arg1, %c0_i32, %c0_i32_0, %c0_i32_1 : i32, i32, i32, i32
  }
  func.func @transform_4(%arg0: i32, %arg1: i32) -> (i32, i32) {
    %c0_i32 = arith.constant 0 : i32
    %c0_i32_0 = arith.constant 0 : i32
    %c0_i32_1 = arith.constant 0 : i32
    return %c0_i32, %c0_i32_0 : i32, i32
  }
  func.func @transform_5(%arg0: i32, %arg1: i32) -> (i32, i32) {
    %c0_i32 = arith.constant 0 : i32
    %c0_i32_0 = arith.constant 0 : i32
    %c0_i32_1 = arith.constant 0 : i32
    return %c0_i32, %c0_i32_0 : i32, i32
  }
  func.func @transform_6(%arg0: i32, %arg1: i32) -> (i32, i32) {
    %c0_i32 = arith.constant 0 : i32
    %c0_i32_0 = arith.constant 0 : i32
    %c0_i32_1 = arith.constant 0 : i32
    return %c0_i32, %c0_i32_0 : i32, i32
  }
  func.func @transform_7(%arg0: i32, %arg1: i32) -> (i32, i32) {
    %c0_i32 = arith.constant 0 : i32
    %c0_i32_0 = arith.constant 0 : i32
    %c0_i32_1 = arith.constant 0 : i32
    return %c0_i32, %c0_i32_0 : i32, i32
  }
  func.func @transform_8(%arg0: i32, %arg1: i32) -> (i32, i32, i32) {
    %c0_i32 = arith.constant 0 : i32
    %c0_i32_0 = arith.constant 0 : i32
    %c0_i32_1 = arith.constant 0 : i32
    return %arg0, %c0_i32, %c0_i32_0 : i32, i32, i32
  }
}

</mosaic_0001>

<llo_original>
// kernel: tpu_custom_call.1
$region0: #{tpu_custom_call.1}
  #allocation0 [shape = 'u32[]', space=smem, size = 0x4, offset = 0x4, fixed_abs, tag = 'smem constant byte address 0x4 - core index']
  #allocation1 [shape = 'u32[144,128]{1,0:T(1,128)}', space=vmem, size = 0x12000, scoped, tag = 'internal scratch']
  #allocation2 [shape = 'f32[32,259]{1,0:T(8,128)}', space=vmem, size = 0xc000, scoped, tag = 'scratch operand']
  #allocation3 [shape = 'f32[32,128]{1,0:T(8,128)}', space=vmem, size = 0x4000, scoped, tag = 'scratch operand']
  #allocation4 [shape = 'f32[1,1]{1,0:T(1,128)S(1)}', space=vmem, size = 0x200, scoped, tag = 'scoped memory for tpu_custom_call.1']
  %s0 = inlined_call_operand.hbm [shape: f32[2,4,130], index: 0, kind: input, shape index: {}]
  %s1 = inlined_call_operand.hbm [shape: f32[3,32,4], index: 1, kind: input, shape index: {}]
  %s2 = inlined_call_operand.hbm [shape: f32[2,2,32,96], index: 2, kind: input, shape index: {}]
  %s3 = inlined_call_operand.hbm [shape: f32[2,2,64,16], index: 3, kind: input, shape index: {}]
  %s4 = inlined_call_operand.hbm [shape: f32[32,32], index: 4, kind: input, shape index: {}]
  %s5 = inlined_call_operand.hbm [shape: f32[32,1], index: 5, kind: input, shape index: {}]
  %s6 = inlined_call_operand.hbm [shape: f32[1,32], index: 6, kind: input, shape index: {}]
  %s7 = inlined_call_operand.<no memory space> [shape: f32[1,1], index: 7, kind: input, shape index: {}]
  %s8 = inlined_call_operand.hbm [shape: f32[2,1,128], index: 8, kind: output, shape index: {}]
  %s9 = sld [smem:[#allocation0]]
  $region101: #{tpu_custom_call.1} parent=0
    _
  %s11 = ssub.s32 1, %s9
  %s12 = scalar_select 0, %s11, %s9
  %v13 = vstv %s7
  %14 = vst [vmem:[#allocation4] sm:$0x1] %v13
  $region1: #{tpu_custom_call.1} parent=0
    #allocation5 [shape = 'u8[8192]{0}', space=vmem, size = 0x2000, scoped, tag = 'input window, operand 0']
    #allocation6 [shape = 's32[2]{0}', space=sflag, size = 0x8, scoped, tag = 'scoped memory for tpu_custom_call.1']
    #allocation7 [shape = 's32[2]{0}', space=sflag, size = 0x8, scoped, tag = 'scoped memory for tpu_custom_call.1']
    #allocation8 [shape = 'u8[49152]{0}', space=vmem, size = 0xc000, scoped, tag = 'input window, operand 1, single buffered']
    #allocation9 [shape = 's32[1]{0}', space=sflag, size = 0x4, scoped, tag = 'scoped memory for tpu_custom_call.1']
    #allocation10 [shape = 'u8[65536]{0}', space=vmem, size = 0x10000, scoped, tag = 'input window, operand 2']
    #allocation11 [shape = 'u8[131072]{0}', space=vmem, size = 0x20000, scoped, tag = 'input window, operand 3']
    #allocation12 [shape = 'u8[16384]{0}', space=vmem, size = 0x4000, scoped, tag = 'input window, operand 4, single buffered']
    #allocation13 [shape = 'u8[16384]{0}', space=vmem, size = 0x4000, scoped, tag = 'input window, operand 5, single buffered']
    #allocation14 [shape = 's32[1]{0}', space=sflag, size = 0x4, scoped, tag = 'scoped memory for tpu_custom_call.1']
    #allocation15 [shape = 'u8[512]{0}', space=vmem, size = 0x400, scoped, tag = 'input window, operand 6, single buffered']
    #allocation16 [shape = 'u8[1024]{0}', space=vmem, size = 0x400, scoped, tag = 'output window, operand 0']
    %15 = vsyncpa [#allocation6], 0
    %s16 = scalar_lea.sflag [#allocation6], 1
    %17 = vsyncpa %s16, 0
    %18 = vsyncpa [#allocation9], 0
    %19 = vsyncpa [#allocation14], 0
    %20 = vsyncpa [#allocation7], 0
    %s21 = scalar_lea.sflag [#allocation7], 1
    %22 = vsyncpa %s21, 0
    loop: start=0, step=1, limit=6
    $region2: #{tpu_custom_call.1} parent=1 // loop_pre_header
      _
    $region3: #{tpu_custom_call.1} parent=1 // loop_header
      %s24 = sphi 0, %s28
      %p25 = scmp.ge.s32.totalorder %s24, 6
      %s31 = sphi 0, %s43
      %s32 = sphi 0, %s39
      %s33 = sphi 0, %s31
      %s34 = sphi 0, %s32
      %s35 = sphi 0, %s33
      %s36 = sphi 0, %s34
      %s46 = sphi 0, %s48
      %s49 = sphi 0, %s46
      %s50 = sphi 0, %s49
      %s66 = sphi 0, %s50
      %s70 = sphi 0, %s70
      %s72 = sphi 0, %s70
      %s73 = sphi 0, %s72
      %s87 = sphi 0, %s73
      %s93 = sphi 0, %s95
      %s96 = sphi 0, %s93
      %s97 = sphi 0, %s96
      %s113 = sphi 0, %s97
      %s119 = sphi 0, %s121
      %s122 = sphi 0, %s119
      %s123 = sphi 0, %s122
      %s139 = sphi 0, %s123
      %s143 = sphi 0, %s143
      %s145 = sphi 0, %s143
      %s146 = sphi 0, %s145
      %s160 = sphi 0, %s146
      %s164 = sphi 0, %s164
      %s166 = sphi 0, %s164
      %s167 = sphi 0, %s166
      %s181 = sphi 0, %s167
      %s185 = sphi 0, %s185
      %s187 = sphi 0, %s185
      %s188 = sphi 0, %s187
      %s202 = sphi 0, %s188
      %s206 = sphi 0, %s206
      %s208 = sphi 0, %s206
      %s209 = sphi 0, %s208
      %s223 = sphi 0, %s209
      %s229 = sphi 0, %s231
      %s232 = sphi 0, %s229
      %s233 = sphi 0, %s232
      %s249 = sphi 0, %s233
    $region4: #{tpu_custom_call.1} parent=1 // loop_header_branch
      %27 = sbr.rel (%p25) target = $region8
    $region5: #{tpu_custom_call.1} parent=1 // loop_body
      %s29 = ssub.s32 %s24, 1
      %s30 = ssub.s32 %s24, 2
      %s37 = sadd.s32 1, %s32
      %p38 = scmp.ge.s32.totalorder %s37, 2
      %s39 = scalar_select %p38, 0, %s37
      %s40 = sadd.s32 1, %s31
      %s41 = scalar_select %p38, %s40, %s31
      %p42 = scmp.ge.s32.totalorder %s41, 2
      %s43 = scalar_select %p42, 0, %s41
      %s44 = ssub.s32 %s31, %s43
      %p45 = scmp.eq.s32.totalorder %s44, 0
      %s47 = sadd.s32 %s46, 1
      %s48 = scalar_select %p45, %s46, %s47
      %p51 = pneg %p45
      %p52 = scmp.eq.s32.totalorder %s24, 3
      %p53 = por %p51, %p52
      %p54 = scmp.ne.s32.totalorder %s46, %s49
      %p55 = scmp.eq.s32.totalorder %s24, 0
      %p56 = por %p54, %p55
      %p57 = scmp.ne.s32.totalorder %s46, %s49
      %p58 = scmp.eq.s32.totalorder %s29, 3
      %p59 = por %p57, %p58
      %p60 = scmp.ne.s32.totalorder %s49, %s50
      %p61 = scmp.eq.s32.totalorder %s29, 0
      %p62 = por %p60, %p61
      %p63 = scmp.ne.s32.totalorder %s49, %s50
      %p64 = scmp.eq.s32.totalorder %s30, 3
      %p65 = por %p63, %p64
      %p67 = scmp.ne.s32.totalorder %s50, %s66
      %p68 = scmp.eq.s32.totalorder %s30, 0
      %p69 = por %p67, %p68
      %s71 = sadd.s32 %s70, 1
      %p74 = scmp.eq.s32.totalorder %s24, 3
      %p75 = scmp.ne.s32.totalorder %s70, %s72
      %p76 = scmp.eq.s32.totalorder %s24, 0
      %p77 = por %p75, %p76
      %p78 = scmp.ne.s32.totalorder %s70, %s72
      %p79 = scmp.eq.s32.totalorder %s29, 3
      %p80 = por %p78, %p79
      %p81 = scmp.ne.s32.totalorder %s72, %s73
      %p82 = scmp.eq.s32.totalorder %s29, 0
      %p83 = por %p81, %p82
      %p84 = scmp.ne.s32.totalorder %s72, %s73
      %p85 = scmp.eq.s32.totalorder %s30, 3
      %p86 = por %p84, %p85
      %p88 = scmp.ne.s32.totalorder %s73, %s87
      %p89 = scmp.eq.s32.totalorder %s30, 0
      %p90 = por %p88, %p89
      %s91 = ssub.s32 %s32, %s39
      %p92 = scmp.eq.s32.totalorder %s91, 0
      %s94 = sadd.s32 %s93, 1
      %s95 = scalar_select %p92, %s93, %s94
      %p98 = pneg %p92
      %p99 = scmp.eq.s32.totalorder %s24, 3
      %p100 = por %p98, %p99
      %p101 = scmp.ne.s32.totalorder %s93, %s96
      %p102 = scmp.eq.s32.totalorder %s24, 0
      %p103 = por %p101, %p102
      %p104 = scmp.ne.s32.totalorder %s93, %s96
      %p105 = scmp.eq.s32.totalorder %s29, 3
      %p106 = por %p104, %p105
      %p107 = scmp.ne.s32.totalorder %s96, %s97
      %p108 = scmp.eq.s32.totalorder %s29, 0
      %p109 = por %p107, %p108
      %p110 = scmp.ne.s32.totalorder %s96, %s97
      %p111 = scmp.eq.s32.totalorder %s30, 3
      %p112 = por %p110, %p111
      %p114 = scmp.ne.s32.totalorder %s97, %s113
      %p115 = scmp.eq.s32.totalorder %s30, 0
      %p116 = por %p114, %p115
      %s117 = ssub.s32 %s32, %s39
      %p118 = scmp.eq.s32.totalorder %s117, 0
      %s120 = sadd.s32 %s119, 1
      %s121 = scalar_select %p118, %s119, %s120
      %p124 = pneg %p118
      %p125 = scmp.eq.s32.totalorder %s24, 3
      %p126 = por %p124, %p125
      %p127 = scmp.ne.s32.totalorder %s119, %s122
      %p128 = scmp.eq.s32.totalorder %s24, 0
      %p129 = por %p127, %p128
      %p130 = scmp.ne.s32.totalorder %s119, %s122
      %p131 = scmp.eq.s32.totalorder %s29, 3
      %p132 = por %p130, %p131
      %p133 = scmp.ne.s32.totalorder %s122, %s123
      %p134 = scmp.eq.s32.totalorder %s29, 0
      %p135 = por %p133, %p134
      %p136 = scmp.ne.s32.totalorder %s122, %s123
      %p137 = scmp.eq.s32.totalorder %s30, 3
      %p138 = por %p136, %p137
      %p140 = scmp.ne.s32.totalorder %s123, %s139
      %p141 = scmp.eq.s32.totalorder %s30, 0
      %p142 = por %p140, %p141
      %s144 = sadd.s32 %s143, 1
      %p147 = scmp.eq.s32.totalorder %s24, 3
      %p148 = scmp.ne.s32.totalorder %s143, %s145
      %p149 = scmp.eq.s32.totalorder %s24, 0
      %p150 = por %p148, %p149
      %p151 = scmp.ne.s32.totalorder %s143, %s145
      %p152 = scmp.eq.s32.totalorder %s29, 3
      %p153 = por %p151, %p152
      %p154 = scmp.ne.s32.totalorder %s145, %s146
      %p155 = scmp.eq.s32.totalorder %s29, 0
      %p156 = por %p154, %p155
      %p157 = scmp.ne.s32.totalorder %s145, %s146
      %p158 = scmp.eq.s32.totalorder %s30, 3
      %p159 = por %p157, %p158
      %p161 = scmp.ne.s32.totalorder %s146, %s160
      %p162 = scmp.eq.s32.totalorder %s30, 0
      %p163 = por %p161, %p162
      %s165 = sadd.s32 %s164, 1
      %p168 = scmp.eq.s32.totalorder %s24, 3
      %p169 = scmp.ne.s32.totalorder %s164, %s166
      %p170 = scmp.eq.s32.totalorder %s24, 0
      %p171 = por %p169, %p170
      %p172 = scmp.ne.s32.totalorder %s164, %s166
      %p173 = scmp.eq.s32.totalorder %s29, 3
      %p174 = por %p172, %p173
      %p175 = scmp.ne.s32.totalorder %s166, %s167
      %p176 = scmp.eq.s32.totalorder %s29, 0
      %p177 = por %p175, %p176
      %p178 = scmp.ne.s32.totalorder %s166, %s167
      %p179 = scmp.eq.s32.totalorder %s30, 3
      %p180 = por %p178, %p179
      %p182 = scmp.ne.s32.totalorder %s167, %s181
      %p183 = scmp.eq.s32.totalorder %s30, 0
      %p184 = por %p182, %p183
      %s186 = sadd.s32 %s185, 1
      %p189 = scmp.eq.s32.totalorder %s24, 3
      %p190 = scmp.ne.s32.totalorder %s185, %s187
      %p191 = scmp.eq.s32.totalorder %s24, 0
      %p192 = por %p190, %p191
      %p193 = scmp.ne.s32.totalorder %s185, %s187
      %p194 = scmp.eq.s32.totalorder %s29, 3
      %p195 = por %p193, %p194
      %p196 = scmp.ne.s32.totalorder %s187, %s188
      %p197 = scmp.eq.s32.totalorder %s29, 0
      %p198 = por %p196, %p197
      %p199 = scmp.ne.s32.totalorder %s187, %s188
      %p200 = scmp.eq.s32.totalorder %s30, 3
      %p201 = por %p199, %p200
      %p203 = scmp.ne.s32.totalorder %s188, %s202
      %p204 = scmp.eq.s32.totalorder %s30, 0
      %p205 = por %p203, %p204
      %s207 = sadd.s32 %s206, 1
      %p210 = scmp.eq.s32.totalorder %s24, 3
      %p211 = scmp.ne.s32.totalorder %s206, %s208
      %p212 = scmp.eq.s32.totalorder %s24, 0
      %p213 = por %p211, %p212
      %p214 = scmp.ne.s32.totalorder %s206, %s208
      %p215 = scmp.eq.s32.totalorder %s29, 3
      %p216 = por %p214, %p215
      %p217 = scmp.ne.s32.totalorder %s208, %s209
      %p218 = scmp.eq.s32.totalorder %s29, 0
      %p219 = por %p217, %p218
      %p220 = scmp.ne.s32.totalorder %s208, %s209
      %p221 = scmp.eq.s32.totalorder %s30, 3
      %p222 = por %p220, %p221
      %p224 = scmp.ne.s32.totalorder %s209, %s223
      %p225 = scmp.eq.s32.totalorder %s30, 0
      %p226 = por %p224, %p225
      %s227 = ssub.s32 %s31, %s43
      %p228 = scmp.eq.s32.totalorder %s227, 0
      %s230 = sadd.s32 %s229, 1
      %s231 = scalar_select %p228, %s229, %s230
      %p234 = pneg %p228
      %p235 = scmp.eq.s32.totalorder %s24, 3
      %p236 = por %p234, %p235
      %p237 = scmp.ne.s32.totalorder %s229, %s232
      %p238 = scmp.eq.s32.totalorder %s24, 0
      %p239 = por %p237, %p238
      %p240 = scmp.ne.s32.totalorder %s229, %s232
      %p241 = scmp.eq.s32.totalorder %s29, 3
      %p242 = por %p240, %p241
      %p243 = scmp.ne.s32.totalorder %s232, %s233
      %p244 = scmp.eq.s32.totalorder %s29, 0
      %p245 = por %p243, %p244
      %p246 = scmp.ne.s32.totalorder %s232, %s233
      %p247 = scmp.eq.s32.totalorder %s30, 3
      %p248 = por %p246, %p247
      %p250 = scmp.ne.s32.totalorder %s233, %s249
      %p251 = scmp.eq.s32.totalorder %s30, 0
      %p252 = por %p250, %p251
      %p253 = scmp.le.s32.totalorder 1, %s24
      %p254 = scmp.lt.s32.totalorder %s24, 5
      %p255 = pnand %p253, %p254
      %p256 = pneg %p255
      // Predicated region
      $region9: #{tpu_custom_call.1} parent=5 // pred_check
        _
      $region10: #{tpu_custom_call.1} parent=5 // pred_check_branch
        %258 = sbr.rel (%p255) target = $region12
      $region11: #{tpu_custom_call.1} parent=5 // pred_region
        %s259 = ssub.s32 %s24, 1
        // Predicated region
        $region13: #{tpu_custom_call.1} parent=11 // pred_check
          %p260 = pneg %p83
        $region14: #{tpu_custom_call.1} parent=11 // pred_check_branch
          %262 = sbr.rel (%p260) target = $region16
        $region15: #{tpu_custom_call.1} parent=11 // pred_region
          %s264 = ssub.s32 1536, 1536
          %265 = vsyncadd [#allocation9], %s264
          %s266 = sshll.u32 [#allocation8], 4
          %s267 = int_to_ptr.vmem [resolvable:$true] %s266
          %272 = dma.hbm_to_vmem [thread:$0]  %s1, 1536, %s267, [#allocation9], 128, 128, 8
        $region16: #{tpu_custom_call.1} parent=11 // pred_fallthru
          _
        // Predicated region
        $region17: #{tpu_custom_call.1} parent=11 // pred_check
          %p273 = pneg %p156
        $region18: #{tpu_custom_call.1} parent=11 // pred_check_branch
          %275 = sbr.rel (%p273) target = $region20
        $region19: #{tpu_custom_call.1} parent=11 // pred_region
          %s277 = ssub.s32 512, 512
          %278 = vsyncadd [#allocation9], %s277
          %s279 = sshll.u32 [#allocation12], 4
          %s280 = int_to_ptr.vmem [resolvable:$true] %s279
          %285 = dma.hbm_to_vmem [thread:$0]  %s4, 512, %s280, [#allocation9], 128, 128, 8
        $region20: #{tpu_custom_call.1} parent=11 // pred_fallthru
          _
        // Predicated region
        $region21: #{tpu_custom_call.1} parent=11 // pred_check
          %p286 = pneg %p177
        $region22: #{tpu_custom_call.1} parent=11 // pred_check_branch
          %288 = sbr.rel (%p286) target = $region24
        $region23: #{tpu_custom_call.1} parent=11 // pred_region
          %s290 = ssub.s32 512, 512
          %291 = vsyncadd [#allocation14], %s290
          %s292 = sshll.u32 [#allocation13], 4
          %s293 = int_to_ptr.vmem [resolvable:$true] %s292
          %298 = dma.hbm_to_vmem [thread:$0]  %s5, 512, %s293, [#allocation14], 128, 128, 8
        $region24: #{tpu_custom_call.1} parent=11 // pred_fallthru
          _
        // Predicated region
        $region25: #{tpu_custom_call.1} parent=11 // pred_check
          %p299 = pneg %p198
        $region26: #{tpu_custom_call.1} parent=11 // pred_check_branch
          %301 = sbr.rel (%p299) target = $region28
        $region27: #{tpu_custom_call.1} parent=11 // pred_region
          %s303 = ssub.s32 16, 16
          %304 = vsyncadd [#allocation14], %s303
          %s306 = sshll.u32 [#allocation15], 4
          %s307 = int_to_ptr.vmem [resolvable:$true] %s306
          %309 = dma.hbm_to_vmem [thread:$0]  %s6, 16, %s307, [#allocation14]
        $region28: #{tpu_custom_call.1} parent=11 // pred_fallthru
          _
        // Predicated region
        $region29: #{tpu_custom_call.1} parent=11 // pred_check
          %p310 = pneg %p219
        $region30: #{tpu_custom_call.1} parent=11 // pred_check_branch
          %312 = sbr.rel (%p310) target = $region32
        $region31: #{tpu_custom_call.1} parent=11 // pred_region
          _
        $region32: #{tpu_custom_call.1} parent=11 // pred_fallthru
          _
      $region12: #{tpu_custom_call.1} parent=5 // pred_fallthru
        _
      %p313 = scmp.lt.s32.totalorder %s24, 4
      // Predicated region
      $region33: #{tpu_custom_call.1} parent=5 // pred_check
        %p314 = pneg %p313
      $region34: #{tpu_custom_call.1} parent=5 // pred_check_branch
        %316 = sbr.rel (%p314) target = $region36
      $region35: #{tpu_custom_call.1} parent=5 // pred_region
        // Predicated region
        $region37: #{tpu_custom_call.1} parent=35 // pred_check
          %p317 = pneg %p56
        $region38: #{tpu_custom_call.1} parent=35 // pred_check_branch
          %319 = sbr.rel (%p317) target = $region40
        $region39: #{tpu_custom_call.1} parent=35 // pred_region
          %s320 = sand.u32 %s24, 1
          %s321 = scalar_lea.sflag [#allocation6], %s320
          %s322 = sand.u32 %s46, 1
          %s323 = smul.addr %s322, 8
          %s324 = scalar_lea.vmem [#allocation5], %s323
          %s326 = ssub.s32 128, 128
          %327 = vsyncadd %s321, %s326
          %s328 = smul.addr %s31, 2
          %s329 = smul.addr %s328, 64
          %s330 = scalar_lea.hbm %s0, %s329
          %s332 = sshll.u32 %s324, 4
          %s333 = int_to_ptr.vmem [resolvable:$true] %s332
          %335 = dma.hbm_to_vmem [thread:$0]  %s330, 128, %s333, %s321
        $region40: #{tpu_custom_call.1} parent=35 // pred_fallthru
          _
        // Predicated region
        $region41: #{tpu_custom_call.1} parent=35 // pred_check
          %p336 = pneg %p103
        $region42: #{tpu_custom_call.1} parent=35 // pred_check_branch
          %338 = sbr.rel (%p336) target = $region44
        $region43: #{tpu_custom_call.1} parent=35 // pred_region
          %s339 = sand.u32 %s24, 1
          %s340 = scalar_lea.sflag [#allocation6], %s339
          %s341 = sand.u32 %s93, 1
          %s342 = smul.addr %s341, 64
          %s343 = scalar_lea.vmem [#allocation10], %s342
          %s345 = ssub.s32 1024, 1024
          %346 = vsyncadd %s340, %s345
          %s347 = smul.addr %s32, 8
          %s348 = smul.addr %s347, 128
          %s349 = scalar_lea.hbm %s2, %s348
          %s350 = sshll.u32 %s343, 4
          %s351 = int_to_ptr.vmem [resolvable:$true] %s350
          %356 = dma.hbm_to_vmem [thread:$0]  %s349, 1024, %s351, %s340, 128, 128, 8
        $region44: #{tpu_custom_call.1} parent=35 // pred_fallthru
          _
        // Predicated region
        $region45: #{tpu_custom_call.1} parent=35 // pred_check
          %p357 = pneg %p129
        $region46: #{tpu_custom_call.1} parent=35 // pred_check_branch
          %359 = sbr.rel (%p357) target = $region48
        $region47: #{tpu_custom_call.1} parent=35 // pred_region
          %s360 = sand.u32 %s24, 1
          %s361 = scalar_lea.sflag [#allocation6], %s360
          %s362 = sand.u32 %s119, 1
          %s363 = smul.addr %s362, 128
          %s364 = scalar_lea.vmem [#allocation11], %s363
          %s366 = ssub.s32 2048, 2048
          %367 = vsyncadd %s361, %s366
          %s368 = smul.addr %s32, 16
          %s369 = smul.addr %s368, 128
          %s370 = scalar_lea.hbm %s3, %s369
          %s371 = sshll.u32 %s364, 4
          %s372 = int_to_ptr.vmem [resolvable:$true] %s371
          %377 = dma.hbm_to_vmem [thread:$0]  %s370, 2048, %s372, %s361, 128, 128, 8
        $region48: #{tpu_custom_call.1} parent=35 // pred_fallthru
          _
      $region36: #{tpu_custom_call.1} parent=5 // pred_fallthru
        _
      %p378 = scmp.le.s32.totalorder 1, %s24
      %p379 = scmp.lt.s32.totalorder %s24, 5
      %p380 = pnand %p378, %p379
      %p381 = pneg %p380
      // Predicated region
      $region49: #{tpu_custom_call.1} parent=5 // pred_check
        _
      $region50: #{tpu_custom_call.1} parent=5 // pred_check_branch
        %383 = sbr.rel (%p380) target = $region52
      $region51: #{tpu_custom_call.1} parent=5 // pred_region
        %s384 = ssub.s32 %s24, 1
        %s385 = sand.u32 %s29, 1
        %s386 = scalar_lea.sflag [#allocation6], %s385
        %s387 = sand.u32 %s49, 1
        %s388 = smul.addr %s387, 8
        %s389 = scalar_lea.vmem [#allocation5], %s388
        // Predicated region
        $region53: #{tpu_custom_call.1} parent=51 // pred_check
          %p390 = pneg %p62
        $region54: #{tpu_custom_call.1} parent=51 // pred_check_branch
          %392 = sbr.rel (%p390) target = $region56
        $region55: #{tpu_custom_call.1} parent=51 // pred_region
          %393 = dma.done %s386, 128
        $region56: #{tpu_custom_call.1} parent=51 // pred_fallthru
          _
        // Predicated region
        $region57: #{tpu_custom_call.1} parent=51 // pred_check
          %p394 = pneg %p83
        $region58: #{tpu_custom_call.1} parent=51 // pred_check_branch
          %396 = sbr.rel (%p394) target = $region60
        $region59: #{tpu_custom_call.1} parent=51 // pred_region
          %397 = dma.done [#allocation9], 1536
        $region60: #{tpu_custom_call.1} parent=51 // pred_fallthru
          _
        %s398 = sand.u32 %s29, 1
        %s399 = scalar_lea.sflag [#allocation6], %s398
        %s400 = sand.u32 %s96, 1
        %s401 = smul.addr %s400, 64
        %s402 = scalar_lea.vmem [#allocation10], %s401
        // Predicated region
        $region61: #{tpu_custom_call.1} parent=51 // pred_check
          %p403 = pneg %p109
        $region62: #{tpu_custom_call.1} parent=51 // pred_check_branch
          %405 = sbr.rel (%p403) target = $region64
        $region63: #{tpu_custom_call.1} parent=51 // pred_region
          %406 = dma.done %s399, 1024
        $region64: #{tpu_custom_call.1} parent=51 // pred_fallthru
          _
        %s407 = sand.u32 %s29, 1
        %s408 = scalar_lea.sflag [#allocation6], %s407
        %s409 = sand.u32 %s122, 1
        %s410 = smul.addr %s409, 128
        %s411 = scalar_lea.vmem [#allocation11], %s410
        // Predicated region
        $region65: #{tpu_custom_call.1} parent=51 // pred_check
          %p412 = pneg %p135
        $region66: #{tpu_custom_call.1} parent=51 // pred_check_branch
          %414 = sbr.rel (%p412) target = $region68
        $region67: #{tpu_custom_call.1} parent=51 // pred_region
          %415 = dma.done %s408, 2048
        $region68: #{tpu_custom_call.1} parent=51 // pred_fallthru
          _
        // Predicated region
        $region69: #{tpu_custom_call.1} parent=51 // pred_check
          %p416 = pneg %p156
        $region70: #{tpu_custom_call.1} parent=51 // pred_check_branch
          %418 = sbr.rel (%p416) target = $region72
        $region71: #{tpu_custom_call.1} parent=51 // pred_region
          %419 = dma.done [#allocation9], 512
        $region72: #{tpu_custom_call.1} parent=51 // pred_fallthru
          _
        // Predicated region
        $region73: #{tpu_custom_call.1} parent=51 // pred_check
          %p420 = pneg %p177
        $region74: #{tpu_custom_call.1} parent=51 // pred_check_branch
          %422 = sbr.rel (%p420) target = $region76
        $region75: #{tpu_custom_call.1} parent=51 // pred_region
          %423 = dma.done [#allocation14], 512
        $region76: #{tpu_custom_call.1} parent=51 // pred_fallthru
          _
        // Predicated region
        $region77: #{tpu_custom_call.1} parent=51 // pred_check
          %p424 = pneg %p198
        $region78: #{tpu_custom_call.1} parent=51 // pred_check_branch
          %426 = sbr.rel (%p424) target = $region80
        $region79: #{tpu_custom_call.1} parent=51 // pred_region
          %427 = dma.done [#allocation14], 16
        $region80: #{tpu_custom_call.1} parent=51 // pred_fallthru
          _
        %s428 = sand.u32 %s29, 1
        %s429 = scalar_lea.sflag [#allocation6], %s428
        %s430 = sand.u32 %s49, 1
        %s431 = smul.addr %s430, 8
        %s432 = scalar_lea.vmem [#allocation5], %s431
        %p433 = pneg %p62
        %p434 = pneg %p59
        %p435 = pneg %p83
        %p436 = pneg %p80
        %s437 = sand.u32 %s29, 1
        %s438 = scalar_lea.sflag [#allocation6], %s437
        %s439 = sand.u32 %s96, 1
        %s440 = smul.addr %s439, 64
        %s441 = scalar_lea.vmem [#allocation10], %s440
        %p442 = pneg %p109
        %p443 = pneg %p106
        %s444 = sand.u32 %s29, 1
        %s445 = scalar_lea.sflag [#allocation6], %s444
        %s446 = sand.u32 %s122, 1
        %s447 = smul.addr %s446, 128
        %s448 = scalar_lea.vmem [#allocation11], %s447
        %p449 = pneg %p135
        %p450 = pneg %p132
        %p451 = pneg %p156
        %p452 = pneg %p153
        %p453 = pneg %p177
        %p454 = pneg %p174
        %p455 = pneg %p198
        %p456 = pneg %p195
        %p457 = pneg %p219
        %p458 = pneg %p216
        %p459 = pneg %p245
        %p460 = pneg %p242
        %s461 = sand.u32 %s232, 1
        %s462 = scalar_lea.sflag [#allocation7], %s461
        %s463 = sand.u32 %s232, 1
        %s464 = scalar_lea.vmem [#allocation16], %s463
        %p465 = scmp.eq.s32.totalorder %s34, 0
        // Predicated region
        $region81: #{tpu_custom_call.1} parent=51 // pred_check
          %p466 = pneg %p465
        $region82: #{tpu_custom_call.1} parent=51 // pred_check_branch
          %468 = sbr.rel (%p466) target = $region84
        $region83: #{tpu_custom_call.1} parent=51 // pred_region
          %v469 = vld [vmem:[%s389] sm:$0xff]
          %v470 = vld [vmem:[#allocation8] sm:$0xff]
          %v471 = vld [vmem:[#allocation8 + $0x8] sm:$0xff]
          %v472 = vld [vmem:[#allocation8 + $0x10] sm:$0xff]
          %v473 = vld [vmem:[#allocation8 + $0x18] sm:$0xff]
          %s474 = scalar_lea.vmem [#allocation8], 32
          %v475 = vld [vmem:[%s474] sm:$0xff]
          %v476 = vld [vmem:[%s474 + $0x8] sm:$0xff]
          %v477 = vld [vmem:[%s474 + $0x10] sm:$0xff]
          %v478 = vld [vmem:[%s474 + $0x18] sm:$0xff]
          %v480 = vcombine.high %v469, %v469
          %481 = vrot.lane.b32.xlu0 %v469, 127
          %v482 = vpop.permute.xlu0 %481
          %483 = vrot.lane.b32.xlu0 %v480, 127
          %v484 = vpop.permute.xlu0 %483
          %vm485 = vcmask 1039360
          %v486 = vsel %vm485, %v482, %v484
          %vm487 = vcmask 31744
          %v489 = vsel %vm487, %v475, 0
          %v492 = vsel %vm487, %v476, 0
          %v495 = vsel %vm487, %v477, 0
          %v498 = vsel %vm487, %v478, 0
          %vm500 = vcmask 1043456
          %v501 = vsel %vm500, %v486, 0
          %503 = vmatprep.subr.mxu0 0.0
          %504 = vmatpush1.msra.mxu0 %v501
          %505 = vmatprep.subr.mxu0 0.0
          %506 = vmatpush1.msra.mxu0 0.0
          %507 = vmatprep.subr.mxu0 0.0
          %508 = vmatpush1.msra.mxu0 0.0
          %509 = vmatprep.subr.mxu0 0.0
          %510 = vmatpush1.msra.mxu0 0.0
          %511 = vmatprep.subr.mxu0 0.0
          %512 = vmatpush1.msra.mxu0 0.0
          %513 = vmatprep.subr.mxu0 0.0
          %514 = vmatpush1.msra.mxu0 0.0
          %515 = vmatprep.subr.mxu0 0.0
          %516 = vmatpush1.msra.mxu0 0.0
          %517 = vmatprep.subr.mxu0 0.0
          %518 = vmatpush1.msra.mxu0 0.0
          %519 = vmatprep.subr.mxu0 0.0
          %520 = vmatpush1.msra.mxu0 0.0
          %521 = vmatprep.subr.mxu0 0.0
          %522 = vmatpush1.msra.mxu0 0.0
          %523 = vmatprep.subr.mxu0 0.0
          %524 = vmatpush1.msra.mxu0 0.0
          %525 = vmatprep.subr.mxu0 0.0
          %526 = vmatpush1.msra.mxu0 0.0
          %527 = vmatprep.subr.mxu0 0.0
          %528 = vmatpush1.msra.mxu0 0.0
          %529 = vmatprep.subr.mxu0 0.0
          %530 = vmatpush1.msra.mxu0 0.0
          %531 = vmatprep.subr.mxu0 0.0
          %532 = vmatpush1.msra.mxu0 0.0
          %533 = vmatprep.subr.mxu0 0.0
          %534 = vmatpush1.msra.mxu0 0.0
          %535 = vmatprep.subr.mxu0 0.0
          %536 = vmatpush1.msra.mxu0 0.0
          %537 = vmatprep.subr.mxu0 0.0
          %538 = vmatpush1.msra.mxu0 0.0
          %539 = vmatprep.subr.mxu0 0.0
          %540 = vmatpush1.msra.mxu0 0.0
          %541 = vmatprep.subr.mxu0 0.0
          %542 = vmatpush1.msra.mxu0 0.0
          %543 = vmatprep.subr.mxu0 0.0
          %544 = vmatpush1.msra.mxu0 0.0
          %545 = vmatprep.subr.mxu0 0.0
          %546 = vmatpush1.msra.mxu0 0.0
          %547 = vmatprep.subr.mxu0 0.0
          %548 = vmatpush1.msra.mxu0 0.0
          %549 = vmatprep.subr.mxu0 0.0
          %550 = vmatpush1.msra.mxu0 0.0
          %551 = vmatprep.subr.mxu0 0.0
          %552 = vmatpush1.msra.mxu0 0.0
          %553 = vmatprep.subr.mxu0 0.0
          %554 = vmatpush1.msra.mxu0 0.0
          %555 = vmatprep.subr.mxu0 0.0
          %556 = vmatpush1.msra.mxu0 0.0
          %557 = vmatprep.subr.mxu0 0.0
          %558 = vmatpush1.msra.mxu0 0.0
          %559 = vmatprep.subr.mxu0 0.0
          %560 = vmatpush1.msra.mxu0 0.0
          %561 = vmatprep.subr.mxu0 0.0
          %562 = vmatpush1.msra.mxu0 0.0
          %563 = vmatprep.subr.mxu0 0.0
          %564 = vmatpush1.msra.mxu0 0.0
          %565 = vmatprep.subr.mxu0 0.0
          %566 = vmatpush1.msra.mxu0 0.0
          %567 = vmatprep.mubr.f32.mxu0 0.0
          %568 = vmatmul.mubr.f32.gmra.mrb[0].mxu0 %v489
          %v569 = vpop.f32.mrb[0].mxu0
          %v570 = vadd.f32 0.0, %v569
          %v571 = vpop.f32.mrb[0].mxu0
          %572 = vmatprep.mubr.f32.mxu0 0.0
          %573 = vmatmul.mubr.f32.gmra.mrb[0].mxu0 %v492
          %v574 = vpop.f32.mrb[0].mxu0
          %v575 = vadd.f32 0.0, %v574
          %v576 = vpop.f32.mrb[0].mxu0
          %577 = vmatprep.mubr.f32.mxu0 0.0
          %578 = vmatmul.mubr.f32.gmra.mrb[0].mxu0 %v495
          %v579 = vpop.f32.mrb[0].mxu0
          %v580 = vadd.f32 0.0, %v579
          %v581 = vpop.f32.mrb[0].mxu0
          %582 = vmatprep.mubr.f32.mxu0 0.0
          %583 = vmatmul.mubr.f32.gmra.mrb[0].mxu0 %v498
          %v584 = vpop.f32.mrb[0].mxu0
          %v585 = vadd.f32 0.0, %v584
          %v586 = vpop.f32.mrb[0].mxu0
          %587 = vdwg.mxu0
          %v589 = vsel %vm487, %v470, 0
          %v592 = vsel %vm487, %v471, 0
          %v595 = vsel %vm487, %v472, 0
          %v598 = vsel %vm487, %v473, 0
          %v600 = vsel %vm500, %v469, 0
          %602 = vmatprep.subr.mxu0 0.0
          %603 = vmatpush1.msra.mxu0 %v600
          %604 = vmatprep.subr.mxu0 0.0
          %605 = vmatpush1.msra.mxu0 0.0
          %606 = vmatprep.subr.mxu0 0.0
          %607 = vmatpush1.msra.mxu0 0.0
          %608 = vmatprep.subr.mxu0 0.0
          %609 = vmatpush1.msra.mxu0 0.0
          %610 = vmatprep.subr.mxu0 0.0
          %611 = vmatpush1.msra.mxu0 0.0
          %612 = vmatprep.subr.mxu0 0.0
          %613 = vmatpush1.msra.mxu0 0.0
          %614 = vmatprep.subr.mxu0 0.0
          %615 = vmatpush1.msra.mxu0 0.0
          %616 = vmatprep.subr.mxu0 0.0
          %617 = vmatpush1.msra.mxu0 0.0
          %618 = vmatprep.subr.mxu0 0.0
          %619 = vmatpush1.msra.mxu0 0.0
          %620 = vmatprep.subr.mxu0 0.0
          %621 = vmatpush1.msra.mxu0 0.0
          %622 = vmatprep.subr.mxu0 0.0
          %623 = vmatpush1.msra.mxu0 0.0
          %624 = vmatprep.subr.mxu0 0.0
          %625 = vmatpush1.msra.mxu0 0.0
          %626 = vmatprep.subr.mxu0 0.0
          %627 = vmatpush1.msra.mxu0 0.0
          %628 = vmatprep.subr.mxu0 0.0
          %629 = vmatpush1.msra.mxu0 0.0
          %630 = vmatprep.subr.mxu0 0.0
          %631 = vmatpush1.msra.mxu0 0.0
          %632 = vmatprep.subr.mxu0 0.0
          %633 = vmatpush1.msra.mxu0 0.0
          %634 = vmatprep.subr.mxu0 0.0
          %635 = vmatpush1.msra.mxu0 0.0
          %636 = vmatprep.subr.mxu0 0.0
          %637 = vmatpush1.msra.mxu0 0.0
          %638 = vmatprep.subr.mxu0 0.0
          %639 = vmatpush1.msra.mxu0 0.0
          %640 = vmatprep.subr.mxu0 0.0
          %641 = vmatpush1.msra.mxu0 0.0
          %642 = vmatprep.subr.mxu0 0.0
          %643 = vmatpush1.msra.mxu0 0.0
          %644 = vmatprep.subr.mxu0 0.0
          %645 = vmatpush1.msra.mxu0 0.0
          %646 = vmatprep.subr.mxu0 0.0
          %647 = vmatpush1.msra.mxu0 0.0
          %648 = vmatprep.subr.mxu0 0.0
          %649 = vmatpush1.msra.mxu0 0.0
          %650 = vmatprep.subr.mxu0 0.0
          %651 = vmatpush1.msra.mxu0 0.0
          %652 = vmatprep.subr.mxu0 0.0
          %653 = vmatpush1.msra.mxu0 0.0
          %654 = vmatprep.subr.mxu0 0.0
          %655 = vmatpush1.msra.mxu0 0.0
          %656 = vmatprep.subr.mxu0 0.0
          %657 = vmatpush1.msra.mxu0 0.0
          %658 = vmatprep.subr.mxu0 0.0
          %659 = vmatpush1.msra.mxu0 0.0
          %660 = vmatprep.subr.mxu0 0.0
          %661 = vmatpush1.msra.mxu0 0.0
          %662 = vmatprep.subr.mxu0 0.0
          %663 = vmatpush1.msra.mxu0 0.0
          %664 = vmatprep.subr.mxu0 0.0
          %665 = vmatpush1.msra.mxu0 0.0
          %666 = vmatprep.mubr.f32.mxu0 0.0
          %667 = vmatmul.mubr.f32.gmra.mrb[0].mxu0 %v589
          %v668 = vpop.f32.mrb[0].mxu0
          %v669 = vadd.f32 %v570, %v668
          %v670 = vpop.f32.mrb[0].mxu0
          %671 = vmatprep.mubr.f32.mxu0 0.0
          %672 = vmatmul.mubr.f32.gmra.mrb[0].mxu0 %v592
          %v673 = vpop.f32.mrb[0].mxu0
          %v674 = vadd.f32 %v575, %v673
          %v675 = vpop.f32.mrb[0].mxu0
          %676 = vmatprep.mubr.f32.mxu0 0.0
          %677 = vmatmul.mubr.f32.gmra.mrb[0].mxu0 %v595
          %v678 = vpop.f32.mrb[0].mxu0
          %v679 = vadd.f32 %v580, %v678
          %v680 = vpop.f32.mrb[0].mxu0
          %681 = vmatprep.mubr.f32.mxu0 0.0
          %682 = vmatmul.mubr.f32.gmra.mrb[0].mxu0 %v598
          %v683 = vpop.f32.mrb[0].mxu0
          %v684 = vadd.f32 %v585, %v683
          %v685 = vpop.f32.mrb[0].mxu0
          %686 = vdwg.mxu0
          %s687 = scalar_lea.vmem [#allocation8], 64
          %v688 = vld [vmem:[%s687] sm:$0xff]
          %v689 = vld [vmem:[%s687 + $0x8] sm:$0xff]
          %v690 = vld [vmem:[%s687 + $0x10] sm:$0xff]
          %v691 = vld [vmem:[%s687 + $0x18] sm:$0xff]
          %692 = vrot.lane.b32.xlu0 %v469, 126
          %v693 = vpop.permute.xlu0 %692
          %694 = vrot.lane.b32.xlu0 %v480, 126
          %v695 = vpop.permute.xlu0 %694
          %vm696 = vcmask 1031168
          %v697 = vsel %vm696, %v693, %v695
          %v699 = vsel %vm487, %v688, 0
          %v702 = vsel %vm487, %v689, 0
          %v705 = vsel %vm487, %v690, 0
          %v708 = vsel %vm487, %v691, 0
          %v710 = vsel %vm500, %v697, 0
          %712 = vmatprep.subr.mxu0 0.0
          %713 = vmatpush1.msra.mxu0 %v710
          %714 = vmatprep.subr.mxu0 0.0
          %715 = vmatpush1.msra.mxu0 0.0
          %716 = vmatprep.subr.mxu0 0.0
          %717 = vmatpush1.msra.mxu0 0.0
          %718 = vmatprep.subr.mxu0 0.0
          %719 = vmatpush1.msra.mxu0 0.0
          %720 = vmatprep.subr.mxu0 0.0
          %721 = vmatpush1.msra.mxu0 0.0
          %722 = vmatprep.subr.mxu0 0.0
          %723 = vmatpush1.msra.mxu0 0.0
          %724 = vmatprep.subr.mxu0 0.0
          %725 = vmatpush1.msra.mxu0 0.0
          %726 = vmatprep.subr.mxu0 0.0
          %727 = vmatpush1.msra.mxu0 0.0
          %728 = vmatprep.subr.mxu0 0.0
          %729 = vmatpush1.msra.mxu0 0.0
          %730 = vmatprep.subr.mxu0 0.0
          %731 = vmatpush1.msra.mxu0 0.0
          %732 = vmatprep.subr.mxu0 0.0
          %733 = vmatpush1.msra.mxu0 0.0
          %734 = vmatprep.subr.mxu0 0.0
          %735 = vmatpush1.msra.mxu0 0.0
          %736 = vmatprep.subr.mxu0 0.0
          %737 = vmatpush1.msra.mxu0 0.0
          %738 = vmatprep.subr.mxu0 0.0
          %739 = vmatpush1.msra.mxu0 0.0
          %740 = vmatprep.subr.mxu0 0.0
          %741 = vmatpush1.msra.mxu0 0.0
          %742 = vmatprep.subr.mxu0 0.0
          %743 = vmatpush1.msra.mxu0 0.0
          %744 = vmatprep.subr.mxu0 0.0
          %745 = vmatpush1.msra.mxu0 0.0
          %746 = vmatprep.subr.mxu0 0.0
          %747 = vmatpush1.msra.mxu0 0.0
          %748 = vmatprep.subr.mxu0 0.0
          %749 = vmatpush1.msra.mxu0 0.0
          %750 = vmatprep.subr.mxu0 0.0
          %751 = vmatpush1.msra.mxu0 0.0
          %752 = vmatprep.subr.mxu0 0.0
          %753 = vmatpush1.msra.mxu0 0.0
          %754 = vmatprep.subr.mxu0 0.0
          %755 = vmatpush1.msra.mxu0 0.0
          %756 = vmatprep.subr.mxu0 0.0
          %757 = vmatpush1.msra.mxu0 0.0
          %758 = vmatprep.subr.mxu0 0.0
          %759 = vmatpush1.msra.mxu0 0.0
          %760 = vmatprep.subr.mxu0 0.0
          %761 = vmatpush1.msra.mxu0 0.0
          %762 = vmatprep.subr.mxu0 0.0
          %763 = vmatpush1.msra.mxu0 0.0
          %764 = vmatprep.subr.mxu0 0.0
          %765 = vmatpush1.msra.mxu0 0.0
          %766 = vmatprep.subr.mxu0 0.0
          %767 = vmatpush1.msra.mxu0 0.0
          %768 = vmatprep.subr.mxu0 0.0
          %769 = vmatpush1.msra.mxu0 0.0
          %770 = vmatprep.subr.mxu0 0.0
          %771 = vmatpush1.msra.mxu0 0.0
          %772 = vmatprep.subr.mxu0 0.0
          %773 = vmatpush1.msra.mxu0 0.0
          %774 = vmatprep.subr.mxu0 0.0
          %775 = vmatpush1.msra.mxu0 0.0
          %776 = vmatprep.mubr.f32.mxu0 0.0
          %777 = vmatmul.mubr.f32.gmra.mrb[0].mxu0 %v699
          %v778 = vpop.f32.mrb[0].mxu0
          %v779 = vadd.f32 0.0, %v778
          %v780 = vpop.f32.mrb[0].mxu0
          %781 = vmatprep.mubr.f32.mxu0 0.0
          %782 = vmatmul.mubr.f32.gmra.mrb[0].mxu0 %v702
          %v783 = vpop.f32.mrb[0].mxu0
          %v784 = vadd.f32 0.0, %v783
          %v785 = vpop.f32.mrb[0].mxu0
          %786 = vmatprep.mubr.f32.mxu0 0.0
          %787 = vmatmul.mubr.f32.gmra.mrb[0].mxu0 %v705
          %v788 = vpop.f32.mrb[0].mxu0
          %v789 = vadd.f32 0.0, %v788
          %v790 = vpop.f32.mrb[0].mxu0
          %791 = vmatprep.mubr.f32.mxu0 0.0
          %792 = vmatmul.mubr.f32.gmra.mrb[0].mxu0 %v708
          %v793 = vpop.f32.mrb[0].mxu0
          %v794 = vadd.f32 0.0, %v793
          %v795 = vpop.f32.mrb[0].mxu0
          %796 = vdwg.mxu0
          %v797 = vadd.f32 %v669, %v779
          %v798 = vadd.f32 %v674, %v784
          %v799 = vadd.f32 %v679, %v789
          %v800 = vadd.f32 %v684, %v794
          %801 = vst [vmem:[#allocation2] sm:$0xff] 0.0
          %802 = vst [vmem:[#allocation2 + $0x8] sm:$0xff] 0.0
          %vm803 = vcmask 23552
          %804 = vst.msk [vmem:[#allocation2 + $0x10] sm:$0xff] %vm803, 0.0
          %805 = vst [vmem:[#allocation2 + $0x18] sm:$0xff] 0.0
          %806 = vst [vmem:[#allocation2 + $0x20] sm:$0xff] 0.0
          %807 = vst.msk [vmem:[#allocation2 + $0x28] sm:$0xff] %vm803, 0.0
          %808 = vst [vmem:[#allocation2 + $0x30] sm:$0xff] 0.0
          %809 = vst [vmem:[#allocation2 + $0x38] sm:$0xff] 0.0
          %810 = vst.msk [vmem:[#allocation2 + $0x40] sm:$0xff] %vm803, 0.0
          %811 = vst [vmem:[#allocation2 + $0x48] sm:$0xff] 0.0
          %812 = vst [vmem:[#allocation2 + $0x50] sm:$0xff] 0.0
          %813 = vst.msk [vmem:[#allocation2 + $0x58] sm:$0xff] %vm803, 0.0
          %814 = vst [vmem:[#allocation2 + $0x8] sm:$0xff] %v797
          %815 = vst [vmem:[#allocation2 + $0x20] sm:$0xff] %v798
          %816 = vst [vmem:[#allocation2 + $0x38] sm:$0xff] %v799
          %817 = vst [vmem:[#allocation2 + $0x50] sm:$0xff] %v800
          %818 = vst [vmem:[#allocation3] sm:$0xff] 0.0
          %819 = vst [vmem:[#allocation3 + $0x8] sm:$0xff] 0.0
          %820 = vst [vmem:[#allocation3 + $0x10] sm:$0xff] 0.0
          %821 = vst [vmem:[#allocation3 + $0x18] sm:$0xff] 0.0
        $region84: #{tpu_custom_call.1} parent=51 // pred_fallthru
          _
        %v822 = vld [vmem:[#allocation2] sm:$0xff]
        %v823 = vld [vmem:[#allocation2 + $0x8] sm:$0xff]
        %v824 = vld [vmem:[#allocation2 + $0x18] sm:$0xff]
        %v825 = vld [vmem:[#allocation2 + $0x20] sm:$0xff]
        %v826 = vld [vmem:[#allocation2 + $0x30] sm:$0xff]
        %v827 = vld [vmem:[#allocation2 + $0x38] sm:$0xff]
        %v828 = vld [vmem:[#allocation2 + $0x48] sm:$0xff]
        %v829 = vld [vmem:[#allocation2 + $0x50] sm:$0xff]
        %v830 = vld [vmem:[#allocation2 + $0x10] sm:$0xff]
        %v831 = vld [vmem:[#allocation2 + $0x28] sm:$0xff]
        %v832 = vld [vmem:[#allocation2 + $0x40] sm:$0xff]
        %v833 = vld [vmem:[#allocation2 + $0x58] sm:$0xff]
        %838 = vrot.lane.b32.xlu0 %v823, 127
        %v839 = vpop.permute.xlu0 %838
        %840 = vrot.lane.b32.xlu0 %v825, 127
        %v841 = vpop.permute.xlu0 %840
        %842 = vrot.lane.b32.xlu0 %v827, 127
        %v843 = vpop.permute.xlu0 %842
        %844 = vrot.lane.b32.xlu0 %v829, 127
        %v845 = vpop.permute.xlu0 %844
        %850 = vrot.lane.b32.xlu0 %v823, 126
        %v851 = vpop.permute.xlu0 %850
        %852 = vrot.lane.b32.xlu0 %v830, 126
        %v853 = vpop.permute.xlu0 %852
        %854 = vrot.lane.b32.xlu0 %v825, 126
        %v855 = vpop.permute.xlu0 %854
        %856 = vrot.lane.b32.xlu0 %v831, 126
        %v857 = vpop.permute.xlu0 %856
        %858 = vrot.lane.b32.xlu0 %v827, 126
        %v859 = vpop.permute.xlu0 %858
        %860 = vrot.lane.b32.xlu0 %v832, 126
        %v861 = vpop.permute.xlu0 %860
        %862 = vrot.lane.b32.xlu0 %v829, 126
        %v863 = vpop.permute.xlu0 %862
        %864 = vrot.lane.b32.xlu0 %v833, 126
        %v865 = vpop.permute.xlu0 %864
        %vm866 = vcmask 1031168
        %v867 = vsel %vm866, %v851, %v853
        %v868 = vsel %vm866, %v855, %v857
        %v869 = vsel %vm866, %v859, %v861
        %v870 = vsel %vm866, %v863, %v865
        %v871 = vld [vmem:[%s402] sm:$0xff]
        %v872 = vld [vmem:[%s402 + $0x8] sm:$0xff]
        %v873 = vld [vmem:[%s402 + $0x10] sm:$0xff]
        %v874 = vld [vmem:[%s402 + $0x18] sm:$0xff]
        %879 = vrot.lane.b32.xlu0 %v822, 1
        %v880 = vpop.permute.xlu0 %879
        %881 = vrot.lane.b32.xlu0 %v823, 1
        %v882 = vpop.permute.xlu0 %881
        %883 = vrot.lane.b32.xlu0 %v824, 1
        %v884 = vpop.permute.xlu0 %883
        %885 = vrot.lane.b32.xlu0 %v825, 1
        %v886 = vpop.permute.xlu0 %885
        %887 = vrot.lane.b32.xlu0 %v826, 1
        %v888 = vpop.permute.xlu0 %887
        %889 = vrot.lane.b32.xlu0 %v827, 1
        %v890 = vpop.permute.xlu0 %889
        %891 = vrot.lane.b32.xlu0 %v828, 1
        %v892 = vpop.permute.xlu0 %891
        %893 = vrot.lane.b32.xlu0 %v829, 1
        %v894 = vpop.permute.xlu0 %893
        %895 = vrot.lane.b32.xlu0 %v839, 1
        %v896 = vpop.permute.xlu0 %895
        %897 = vrot.lane.b32.xlu0 %v841, 1
        %v898 = vpop.permute.xlu0 %897
        %899 = vrot.lane.b32.xlu0 %v843, 1
        %v900 = vpop.permute.xlu0 %899
        %901 = vrot.lane.b32.xlu0 %v845, 1
        %v902 = vpop.permute.xlu0 %901
        %903 = vrot.lane.b32.xlu0 %v851, 1
        %v904 = vpop.permute.xlu0 %903
        %905 = vrot.lane.b32.xlu0 %v867, 1
        %v906 = vpop.permute.xlu0 %905
        %907 = vrot.lane.b32.xlu0 %v855, 1
        %v908 = vpop.permute.xlu0 %907
        %909 = vrot.lane.b32.xlu0 %v868, 1
        %v910 = vpop.permute.xlu0 %909
        %911 = vrot.lane.b32.xlu0 %v859, 1
        %v912 = vpop.permute.xlu0 %911
        %913 = vrot.lane.b32.xlu0 %v869, 1
        %v914 = vpop.permute.xlu0 %913
        %915 = vrot.lane.b32.xlu0 %v863, 1
        %v916 = vpop.permute.xlu0 %915
        %917 = vrot.lane.b32.xlu0 %v870, 1
        %v918 = vpop.permute.xlu0 %917
        %vm919 = vcmask 7168
        %v920 = vsel %vm919, %v880, %v882
        %v921 = vsel %vm919, %v884, %v886
        %v922 = vsel %vm919, %v888, %v890
        %v923 = vsel %vm919, %v892, %v894
        %v924 = vsel %vm919, %v904, %v906
        %v925 = vsel %vm919, %v908, %v910
        %v926 = vsel %vm919, %v912, %v914
        %v927 = vsel %vm919, %v916, %v918
        %vm940 = vcmask 785408
        %v942 = vsel %vm940, %v871, 0
        %v945 = vsel %vm940, %v872, 0
        %v948 = vsel %vm940, %v873, 0
        %v951 = vsel %vm940, %v874, 0
        %953 = vmatprep.subr.mxu0 0.0
        %954 = vmatpush1.msra.mxu0 %v920
        %955 = vmatprep.subr.mxu0 0.0
        %956 = vmatpush1.msra.mxu0 %v921
        %957 = vmatprep.subr.mxu0 0.0
        %958 = vmatpush1.msra.mxu0 %v922
        %959 = vmatprep.subr.mxu0 0.0
        %960 = vmatpush1.msra.mxu0 %v923
        %961 = vmatprep.subr.mxu0 0.0
        %962 = vmatpush1.msra.mxu0 %v896
        %963 = vmatprep.subr.mxu0 0.0
        %964 = vmatpush1.msra.mxu0 %v898
        %965 = vmatprep.subr.mxu0 0.0
        %966 = vmatpush1.msra.mxu0 %v900
        %967 = vmatprep.subr.mxu0 0.0
        %968 = vmatpush1.msra.mxu0 %v902
        %969 = vmatprep.subr.mxu0 0.0
        %970 = vmatpush1.msra.mxu0 %v924
        %971 = vmatprep.subr.mxu0 0.0
        %972 = vmatpush1.msra.mxu0 %v925
        %973 = vmatprep.subr.mxu0 0.0
        %974 = vmatpush1.msra.mxu0 %v926
        %975 = vmatprep.subr.mxu0 0.0
        %976 = vmatpush1.msra.mxu0 %v927
        %977 = vmatprep.subr.mxu0 0.0
        %978 = vmatpush1.msra.mxu0 0.0
        %979 = vmatprep.subr.mxu0 0.0
        %980 = vmatpush1.msra.mxu0 0.0
        %981 = vmatprep.subr.mxu0 0.0
        %982 = vmatpush1.msra.mxu0 0.0
        %983 = vmatprep.subr.mxu0 0.0
        %984 = vmatpush1.msra.mxu0 0.0
        %985 = vmatprep.subr.mxu0 0.0
        %986 = vmatpush1.msra.mxu0 0.0
        %987 = vmatprep.subr.mxu0 0.0
        %988 = vmatpush1.msra.mxu0 0.0
        %989 = vmatprep.subr.mxu0 0.0
        %990 = vmatpush1.msra.mxu0 0.0
        %991 = vmatprep.subr.mxu0 0.0
        %992 = vmatpush1.msra.mxu0 0.0
        %993 = vmatprep.subr.mxu0 0.0
        %994 = vmatpush1.msra.mxu0 0.0
        %995 = vmatprep.subr.mxu0 0.0
        %996 = vmatpush1.msra.mxu0 0.0
        %997 = vmatprep.subr.mxu0 0.0
        %998 = vmatpush1.msra.mxu0 0.0
        %999 = vmatprep.subr.mxu0 0.0
        %1000 = vmatpush1.msra.mxu0 0.0
        %1001 = vmatprep.subr.mxu0 0.0
        %1002 = vmatpush1.msra.mxu0 0.0
        %1003 = vmatprep.subr.mxu0 0.0
        %1004 = vmatpush1.msra.mxu0 0.0
        %1005 = vmatprep.subr.mxu0 0.0
        %1006 = vmatpush1.msra.mxu0 0.0
        %1007 = vmatprep.subr.mxu0 0.0
        %1008 = vmatpush1.msra.mxu0 0.0
        %1009 = vmatprep.subr.mxu0 0.0
        %1010 = vmatpush1.msra.mxu0 0.0
        %1011 = vmatprep.subr.mxu0 0.0
        %1012 = vmatpush1.msra.mxu0 0.0
        %1013 = vmatprep.subr.mxu0 0.0
        %1014 = vmatpush1.msra.mxu0 0.0
        %1015 = vmatprep.subr.mxu0 0.0
        %1016 = vmatpush1.msra.mxu0 0.0
        %1017 = vmatprep.mubr.f32.mxu0 0.0
        %1018 = vmatmul.mubr.f32.gmra.mrb[0].mxu0 %v942
        %v1019 = vpop.f32.mrb[0].mxu0
        %v1020 = vadd.f32 0.0, %v1019
        %v1021 = vpop.f32.mrb[0].mxu0
        %1022 = vmatprep.mubr.f32.mxu0 0.0
        %1023 = vmatmul.mubr.f32.gmra.mrb[0].mxu0 %v945
        %v1024 = vpop.f32.mrb[0].mxu0
        %v1025 = vadd.f32 0.0, %v1024
        %v1026 = vpop.f32.mrb[0].mxu0
        %1027 = vmatprep.mubr.f32.mxu0 0.0
        %1028 = vmatmul.mubr.f32.gmra.mrb[0].mxu0 %v948
        %v1029 = vpop.f32.mrb[0].mxu0
        %v1030 = vadd.f32 0.0, %v1029
        %v1031 = vpop.f32.mrb[0].mxu0
        %1032 = vmatprep.mubr.f32.mxu0 0.0
        %1033 = vmatmul.mubr.f32.gmra.mrb[0].mxu0 %v951
        %v1034 = vpop.f32.mrb[0].mxu0
        %v1035 = vadd.f32 0.0, %v1034
        %v1036 = vpop.f32.mrb[0].mxu0
        %1037 = vdwg.mxu0
        %v1038 = vtanh.pop %v1020
        %v1039 = vtanh.pop %v1025
        %v1040 = vxor.u32 %v1030, 2147483648
        %v1041 = vxor.u32 %v1035, 2147483648
        %v1042 = vmul.f32 %v1040, 1.442695
        %v1043 = vpow.pop %v1042
        %v1044 = vmul.f32 %v1041, 1.442695
        %v1045 = vpow.pop %v1044
        %v1046 = vadd.f32 %v1043, 1.0
        %v1047 = vadd.f32 %v1045, 1.0
        %v1048 = vrcp.pop %v1046
        %v1049 = vmul.f32 1.0, %v1048
        %v1050 = vrcp.pop %v1047
        %v1051 = vmul.f32 1.0, %v1050
        %v1052 = vmul.f32 %v1038, %v1049
        %v1053 = vmul.f32 %v1039, %v1051
        %v1054 = vld [vmem:[%s411] sm:$0xff]
        %v1055 = vld [vmem:[%s411 + $0x8] sm:$0xff]
        %v1056 = vld [vmem:[%s411 + $0x10] sm:$0xff]
        %v1057 = vld [vmem:[%s411 + $0x18] sm:$0xff]
        %v1058 = vld [vmem:[%s411 + $0x20] sm:$0xff]
        %v1059 = vld [vmem:[%s411 + $0x28] sm:$0xff]
        %v1060 = vld [vmem:[%s411 + $0x30] sm:$0xff]
        %v1061 = vld [vmem:[%s411 + $0x38] sm:$0xff]
        %vm1062 = vcmask 130048
        %v1064 = vsel %vm1062, %v1054, 0
        %v1067 = vsel %vm1062, %v1055, 0
        %v1070 = vsel %vm1062, %v1056, 0
        %v1073 = vsel %vm1062, %v1057, 0
        %v1076 = vsel %vm1062, %v1058, 0
        %v1079 = vsel %vm1062, %v1059, 0
        %v1082 = vsel %vm1062, %v1060, 0
        %v1085 = vsel %vm1062, %v1061, 0
        %1087 = vmatprep.subr.mxu0 0.0
        %1088 = vmatpush1.msra.mxu0 %v1052
        %1089 = vmatprep.subr.mxu0 0.0
        %1090 = vmatpush1.msra.mxu0 %v1053
        %1091 = vmatprep.subr.mxu0 0.0
        %1092 = vmatpush1.msra.mxu0 0.0
        %1093 = vmatprep.subr.mxu0 0.0
        %1094 = vmatpush1.msra.mxu0 0.0
        %1095 = vmatprep.subr.mxu0 0.0
        %1096 = vmatpush1.msra.mxu0 0.0
        %1097 = vmatprep.subr.mxu0 0.0
        %1098 = vmatpush1.msra.mxu0 0.0
        %1099 = vmatprep.subr.mxu0 0.0
        %1100 = vmatpush1.msra.mxu0 0.0
        %1101 = vmatprep.subr.mxu0 0.0
        %1102 = vmatpush1.msra.mxu0 0.0
        %1103 = vmatprep.subr.mxu0 0.0
        %1104 = vmatpush1.msra.mxu0 0.0
        %1105 = vmatprep.subr.mxu0 0.0
        %1106 = vmatpush1.msra.mxu0 0.0
        %1107 = vmatprep.subr.mxu0 0.0
        %1108 = vmatpush1.msra.mxu0 0.0
        %1109 = vmatprep.subr.mxu0 0.0
        %1110 = vmatpush1.msra.mxu0 0.0
        %1111 = vmatprep.subr.mxu0 0.0
        %1112 = vmatpush1.msra.mxu0 0.0
        %1113 = vmatprep.subr.mxu0 0.0
        %1114 = vmatpush1.msra.mxu0 0.0
        %1115 = vmatprep.subr.mxu0 0.0
        %1116 = vmatpush1.msra.mxu0 0.0
        %1117 = vmatprep.subr.mxu0 0.0
        %1118 = vmatpush1.msra.mxu0 0.0
        %1119 = vmatprep.subr.mxu0 0.0
        %1120 = vmatpush1.msra.mxu0 0.0
        %1121 = vmatprep.subr.mxu0 0.0
        %1122 = vmatpush1.msra.mxu0 0.0
        %1123 = vmatprep.subr.mxu0 0.0
        %1124 = vmatpush1.msra.mxu0 0.0
        %1125 = vmatprep.subr.mxu0 0.0
        %1126 = vmatpush1.msra.mxu0 0.0
        %1127 = vmatprep.subr.mxu0 0.0
        %1128 = vmatpush1.msra.mxu0 0.0
        %1129 = vmatprep.subr.mxu0 0.0
        %1130 = vmatpush1.msra.mxu0 0.0
        %1131 = vmatprep.subr.mxu0 0.0
        %1132 = vmatpush1.msra.mxu0 0.0
        %1133 = vmatprep.subr.mxu0 0.0
        %1134 = vmatpush1.msra.mxu0 0.0
        %1135 = vmatprep.subr.mxu0 0.0
        %1136 = vmatpush1.msra.mxu0 0.0
        %1137 = vmatprep.subr.mxu0 0.0
        %1138 = vmatpush1.msra.mxu0 0.0
        %1139 = vmatprep.subr.mxu0 0.0
        %1140 = vmatpush1.msra.mxu0 0.0
        %1141 = vmatprep.subr.mxu0 0.0
        %1142 = vmatpush1.msra.mxu0 0.0
        %1143 = vmatprep.subr.mxu0 0.0
        %1144 = vmatpush1.msra.mxu0 0.0
        %1145 = vmatprep.subr.mxu0 0.0
        %1146 = vmatpush1.msra.mxu0 0.0
        %1147 = vmatprep.subr.mxu0 0.0
        %1148 = vmatpush1.msra.mxu0 0.0
        %1149 = vmatprep.subr.mxu0 0.0
        %1150 = vmatpush1.msra.mxu0 0.0
        %1151 = vmatprep.mubr.f32.mxu0 0.0
        %1152 = vmatmul.mubr.f32.gmra.mrb[0].mxu0 %v1064
        %v1153 = vpop.f32.mrb[0].mxu0
        %v1154 = vadd.f32 0.0, %v1153
        %v1155 = vpop.f32.mrb[0].mxu0
        %1156 = vmatprep.mubr.f32.mxu0 0.0
        %1157 = vmatmul.mubr.f32.gmra.mrb[0].mxu0 %v1067
        %v1158 = vpop.f32.mrb[0].mxu0
        %v1159 = vadd.f32 0.0, %v1158
        %v1160 = vpop.f32.mrb[0].mxu0
        %1161 = vmatprep.mubr.f32.mxu0 0.0
        %1162 = vmatmul.mubr.f32.gmra.mrb[0].mxu0 %v1070
        %v1163 = vpop.f32.mrb[0].mxu0
        %v1164 = vadd.f32 0.0, %v1163
        %v1165 = vpop.f32.mrb[0].mxu0
        %1166 = vmatprep.mubr.f32.mxu0 0.0
        %1167 = vmatmul.mubr.f32.gmra.mrb[0].mxu0 %v1073
        %v1168 = vpop.f32.mrb[0].mxu0
        %v1169 = vadd.f32 0.0, %v1168
        %v1170 = vpop.f32.mrb[0].mxu0
        %1171 = vmatprep.mubr.f32.mxu0 0.0
        %1172 = vmatmul.mubr.f32.gmra.mrb[0].mxu0 %v1076
        %v1173 = vpop.f32.mrb[0].mxu0
        %v1174 = vadd.f32 0.0, %v1173
        %v1175 = vpop.f32.mrb[0].mxu0
        %1176 = vmatprep.mubr.f32.mxu0 0.0
        %1177 = vmatmul.mubr.f32.gmra.mrb[0].mxu0 %v1079
        %v1178 = vpop.f32.mrb[0].mxu0
        %v1179 = vadd.f32 0.0, %v1178
        %v1180 = vpop.f32.mrb[0].mxu0
        %1181 = vmatprep.mubr.f32.mxu0 0.0
        %1182 = vmatmul.mubr.f32.gmra.mrb[0].mxu0 %v1082
        %v1183 = vpop.f32.mrb[0].mxu0
        %v1184 = vadd.f32 0.0, %v1183
        %v1185 = vpop.f32.mrb[0].mxu0
        %1186 = vmatprep.mubr.f32.mxu0 0.0
        %1187 = vmatmul.mubr.f32.gmra.mrb[0].mxu0 %v1085
        %v1188 = vpop.f32.mrb[0].mxu0
        %v1189 = vadd.f32 0.0, %v1188
        %v1190 = vpop.f32.mrb[0].mxu0
        %1191 = vdwg.mxu0
        %v1192 = vld [vmem:[#allocation3] sm:$0xff]
        %v1193 = vld [vmem:[#allocation3 + $0x8] sm:$0xff]
        %v1194 = vld [vmem:[#allocation3 + $0x10] sm:$0xff]
        %v1195 = vld [vmem:[#allocation3 + $0x18] sm:$0xff]
        %v1196 = vadd.f32 %v1192, %v1154
        %v1197 = vadd.f32 %v1193, %v1159
        %v1198 = vadd.f32 %v1194, %v1164
        %v1199 = vadd.f32 %v1195, %v1169
        %1200 = vst [vmem:[#allocation3] sm:$0xff] %v1196
        %1201 = vst [vmem:[#allocation3 + $0x8] sm:$0xff] %v1197
        %1202 = vst [vmem:[#allocation3 + $0x10] sm:$0xff] %v1198
        %1203 = vst [vmem:[#allocation3 + $0x18] sm:$0xff] %v1199
        %v1204 = vld [vmem:[#allocation2 + $0x8] sm:$0xff]
        %v1205 = vld [vmem:[#allocation2 + $0x20] sm:$0xff]
        %v1206 = vld [vmem:[#allocation2 + $0x38] sm:$0xff]
        %v1207 = vld [vmem:[#allocation2 + $0x50] sm:$0xff]
        %v1208 = vadd.f32 %v1174, %v1204
        %v1209 = vadd.f32 %v1179, %v1205
        %v1210 = vadd.f32 %v1184, %v1206
        %v1211 = vadd.f32 %v1189, %v1207
        %v1212 = vmul.f32 %v1208, 0.70710677
        %v1213 = vmul.f32 %v1209, 0.70710677
        %v1214 = vmul.f32 %v1210, 0.70710677
        %v1215 = vmul.f32 %v1211, 0.70710677
        %1216 = vst [vmem:[#allocation2 + $0x8] sm:$0xff] %v1212
        %1217 = vst [vmem:[#allocation2 + $0x20] sm:$0xff] %v1213
        %1218 = vst [vmem:[#allocation2 + $0x38] sm:$0xff] %v1214
        %1219 = vst [vmem:[#allocation2 + $0x50] sm:$0xff] %v1215
        %v1220 = vld [vmem:[#allocation2] sm:$0xff]
        %v1221 = vld [vmem:[#allocation2 + $0x8] sm:$0xff]
        %v1222 = vld [vmem:[#allocation2 + $0x18] sm:$0xff]
        %v1223 = vld [vmem:[#allocation2 + $0x20] sm:$0xff]
        %v1224 = vld [vmem:[#allocation2 + $0x30] sm:$0xff]
        %v1225 = vld [vmem:[#allocation2 + $0x38] sm:$0xff]
        %v1226 = vld [vmem:[#allocation2 + $0x48] sm:$0xff]
        %v1227 = vld [vmem:[#allocation2 + $0x50] sm:$0xff]
        %v1228 = vld [vmem:[#allocation2 + $0x10] sm:$0xff]
        %v1229 = vld [vmem:[#allocation2 + $0x28] sm:$0xff]
        %v1230 = vld [vmem:[#allocation2 + $0x40] sm:$0xff]
        %v1231 = vld [vmem:[#allocation2 + $0x58] sm:$0xff]
        %1236 = vrot.lane.b32.xlu0 %v1221, 125
        %v1237 = vpop.permute.xlu0 %1236
        %1238 = vrot.lane.b32.xlu0 %v1223, 125
        %v1239 = vpop.permute.xlu0 %1238
        %1240 = vrot.lane.b32.xlu0 %v1225, 125
        %v1241 = vpop.permute.xlu0 %1240
        %1242 = vrot.lane.b32.xlu0 %v1227, 125
        %v1243 = vpop.permute.xlu0 %1242
        %1248 = vrot.lane.b32.xlu0 %v1221, 122
        %v1249 = vpop.permute.xlu0 %1248
        %1250 = vrot.lane.b32.xlu0 %v1228, 122
        %v1251 = vpop.permute.xlu0 %1250
        %1252 = vrot.lane.b32.xlu0 %v1223, 122
        %v1253 = vpop.permute.xlu0 %1252
        %1254 = vrot.lane.b32.xlu0 %v1229, 122
        %v1255 = vpop.permute.xlu0 %1254
        %1256 = vrot.lane.b32.xlu0 %v1225, 122
        %v1257 = vpop.permute.xlu0 %1256
        %1258 = vrot.lane.b32.xlu0 %v1230, 122
        %v1259 = vpop.permute.xlu0 %1258
        %1260 = vrot.lane.b32.xlu0 %v1227, 122
        %v1261 = vpop.permute.xlu0 %1260
        %1262 = vrot.lane.b32.xlu0 %v1231, 122
        %v1263 = vpop.permute.xlu0 %1262
        %vm1264 = vcmask 998400
        %v1265 = vsel %vm1264, %v1249, %v1251
        %v1266 = vsel %vm1264, %v1253, %v1255
        %v1267 = vsel %vm1264, %v1257, %v1259
        %v1268 = vsel %vm1264, %v1261, %v1263
        %s1269 = scalar_lea.vmem %s402, 32 [#allocation10]
        %v1270 = vld [vmem:[%s1269] sm:$0xff]
        %v1271 = vld [vmem:[%s1269 + $0x8] sm:$0xff]
        %v1272 = vld [vmem:[%s1269 + $0x10] sm:$0xff]
        %v1273 = vld [vmem:[%s1269 + $0x18] sm:$0xff]
        %1278 = vrot.lane.b32.xlu0 %v1220, 3
        %v1279 = vpop.permute.xlu0 %1278
        %1280 = vrot.lane.b32.xlu0 %v1221, 3
        %v1281 = vpop.permute.xlu0 %1280
        %1282 = vrot.lane.b32.xlu0 %v1222, 3
        %v1283 = vpop.permute.xlu0 %1282
        %1284 = vrot.lane.b32.xlu0 %v1223, 3
        %v1285 = vpop.permute.xlu0 %1284
        %1286 = vrot.lane.b32.xlu0 %v1224, 3
        %v1287 = vpop.permute.xlu0 %1286
        %1288 = vrot.lane.b32.xlu0 %v1225, 3
        %v1289 = vpop.permute.xlu0 %1288
        %1290 = vrot.lane.b32.xlu0 %v1226, 3
        %v1291 = vpop.permute.xlu0 %1290
        %1292 = vrot.lane.b32.xlu0 %v1227, 3
        %v1293 = vpop.permute.xlu0 %1292
        %1294 = vrot.lane.b32.xlu0 %v1237, 3
        %v1295 = vpop.permute.xlu0 %1294
        %1296 = vrot.lane.b32.xlu0 %v1239, 3
        %v1297 = vpop.permute.xlu0 %1296
        %1298 = vrot.lane.b32.xlu0 %v1241, 3
        %v1299 = vpop.permute.xlu0 %1298
        %1300 = vrot.lane.b32.xlu0 %v1243, 3
        %v1301 = vpop.permute.xlu0 %1300
        %1302 = vrot.lane.b32.xlu0 %v1249, 3
        %v1303 = vpop.permute.xlu0 %1302
        %1304 = vrot.lane.b32.xlu0 %v1265, 3
        %v1305 = vpop.permute.xlu0 %1304
        %1306 = vrot.lane.b32.xlu0 %v1253, 3
        %v1307 = vpop.permute.xlu0 %1306
        %1308 = vrot.lane.b32.xlu0 %v1266, 3
        %v1309 = vpop.permute.xlu0 %1308
        %1310 = vrot.lane.b32.xlu0 %v1257, 3
        %v1311 = vpop.permute.xlu0 %1310
        %1312 = vrot.lane.b32.xlu0 %v1267, 3
        %v1313 = vpop.permute.xlu0 %1312
        %1314 = vrot.lane.b32.xlu0 %v1261, 3
        %v1315 = vpop.permute.xlu0 %1314
        %1316 = vrot.lane.b32.xlu0 %v1268, 3
        %v1317 = vpop.permute.xlu0 %1316
        %vm1318 = vcmask 23552
        %v1319 = vsel %vm1318, %v1279, %v1281
        %v1320 = vsel %vm1318, %v1283, %v1285
        %v1321 = vsel %vm1318, %v1287, %v1289
        %v1322 = vsel %vm1318, %v1291, %v1293
        %v1323 = vsel %vm1318, %v1303, %v1305
        %v1324 = vsel %vm1318, %v1307, %v1309
        %v1325 = vsel %vm1318, %v1311, %v1313
        %v1326 = vsel %vm1318, %v1315, %v1317
        %v1340 = vsel %vm940, %v1270, 0
        %v1343 = vsel %vm940, %v1271, 0
        %v1346 = vsel %vm940, %v1272, 0
        %v1349 = vsel %vm940, %v1273, 0
        %1351 = vmatprep.subr.mxu0 0.0
        %1352 = vmatpush1.msra.mxu0 %v1319
        %1353 = vmatprep.subr.mxu0 0.0
        %1354 = vmatpush1.msra.mxu0 %v1320
        %1355 = vmatprep.subr.mxu0 0.0
        %1356 = vmatpush1.msra.mxu0 %v1321
        %1357 = vmatprep.subr.mxu0 0.0
        %1358 = vmatpush1.msra.mxu0 %v1322
        %1359 = vmatprep.subr.mxu0 0.0
        %1360 = vmatpush1.msra.mxu0 %v1295
        %1361 = vmatprep.subr.mxu0 0.0
        %1362 = vmatpush1.msra.mxu0 %v1297
        %1363 = vmatprep.subr.mxu0 0.0
        %1364 = vmatpush1.msra.mxu0 %v1299
        %1365 = vmatprep.subr.mxu0 0.0
        %1366 = vmatpush1.msra.mxu0 %v1301
        %1367 = vmatprep.subr.mxu0 0.0
        %1368 = vmatpush1.msra.mxu0 %v1323
        %1369 = vmatprep.subr.mxu0 0.0
        %1370 = vmatpush1.msra.mxu0 %v1324
        %1371 = vmatprep.subr.mxu0 0.0
        %1372 = vmatpush1.msra.mxu0 %v1325
        %1373 = vmatprep.subr.mxu0 0.0
        %1374 = vmatpush1.msra.mxu0 %v1326
        %1375 = vmatprep.subr.mxu0 0.0
        %1376 = vmatpush1.msra.mxu0 0.0
        %1377 = vmatprep.subr.mxu0 0.0
        %1378 = vmatpush1.msra.mxu0 0.0
        %1379 = vmatprep.subr.mxu0 0.0
        %1380 = vmatpush1.msra.mxu0 0.0
        %1381 = vmatprep.subr.mxu0 0.0
        %1382 = vmatpush1.msra.mxu0 0.0
        %1383 = vmatprep.subr.mxu0 0.0
        %1384 = vmatpush1.msra.mxu0 0.0
        %1385 = vmatprep.subr.mxu0 0.0
        %1386 = vmatpush1.msra.mxu0 0.0
        %1387 = vmatprep.subr.mxu0 0.0
        %1388 = vmatpush1.msra.mxu0 0.0
        %1389 = vmatprep.subr.mxu0 0.0
        %1390 = vmatpush1.msra.mxu0 0.0
        %1391 = vmatprep.subr.mxu0 0.0
        %1392 = vmatpush1.msra.mxu0 0.0
        %1393 = vmatprep.subr.mxu0 0.0
        %1394 = vmatpush1.msra.mxu0 0.0
        %1395 = vmatprep.subr.mxu0 0.0
        %1396 = vmatpush1.msra.mxu0 0.0
        %1397 = vmatprep.subr.mxu0 0.0
        %1398 = vmatpush1.msra.mxu0 0.0
        %1399 = vmatprep.subr.mxu0 0.0
        %1400 = vmatpush1.msra.mxu0 0.0
        %1401 = vmatprep.subr.mxu0 0.0
        %1402 = vmatpush1.msra.mxu0 0.0
        %1403 = vmatprep.subr.mxu0 0.0
        %1404 = vmatpush1.msra.mxu0 0.0
        %1405 = vmatprep.subr.mxu0 0.0
        %1406 = vmatpush1.msra.mxu0 0.0
        %1407 = vmatprep.subr.mxu0 0.0
        %1408 = vmatpush1.msra.mxu0 0.0
        %1409 = vmatprep.subr.mxu0 0.0
        %1410 = vmatpush1.msra.mxu0 0.0
        %1411 = vmatprep.subr.mxu0 0.0
        %1412 = vmatpush1.msra.mxu0 0.0
        %1413 = vmatprep.subr.mxu0 0.0
        %1414 = vmatpush1.msra.mxu0 0.0
        %1415 = vmatprep.mubr.f32.mxu0 0.0
        %1416 = vmatmul.mubr.f32.gmra.mrb[0].mxu0 %v1340
        %v1417 = vpop.f32.mrb[0].mxu0
        %v1418 = vadd.f32 0.0, %v1417
        %v1419 = vpop.f32.mrb[0].mxu0
        %1420 = vmatprep.mubr.f32.mxu0 0.0
        %1421 = vmatmul.mubr.f32.gmra.mrb[0].mxu0 %v1343
        %v1422 = vpop.f32.mrb[0].mxu0
        %v1423 = vadd.f32 0.0, %v1422
        %v1424 = vpop.f32.mrb[0].mxu0
        %1425 = vmatprep.mubr.f32.mxu0 0.0
        %1426 = vmatmul.mubr.f32.gmra.mrb[0].mxu0 %v1346
        %v1427 = vpop.f32.mrb[0].mxu0
        %v1428 = vadd.f32 0.0, %v1427
        %v1429 = vpop.f32.mrb[0].mxu0
        %1430 = vmatprep.mubr.f32.mxu0 0.0
        %1431 = vmatmul.mubr.f32.gmra.mrb[0].mxu0 %v1349
        %v1432 = vpop.f32.mrb[0].mxu0
        %v1433 = vadd.f32 0.0, %v1432
        %v1434 = vpop.f32.mrb[0].mxu0
        %1435 = vdwg.mxu0
        %v1436 = vtanh.pop %v1418
        %v1437 = vtanh.pop %v1423
        %v1438 = vxor.u32 %v1428, 2147483648
        %v1439 = vxor.u32 %v1433, 2147483648
        %v1440 = vmul.f32 %v1438, 1.442695
        %v1441 = vpow.pop %v1440
        %v1442 = vmul.f32 %v1439, 1.442695
        %v1443 = vpow.pop %v1442
        %v1444 = vadd.f32 %v1441, 1.0
        %v1445 = vadd.f32 %v1443, 1.0
        %v1446 = vrcp.pop %v1444
        %v1447 = vmul.f32 1.0, %v1446
        %v1448 = vrcp.pop %v1445
        %v1449 = vmul.f32 1.0, %v1448
        %v1450 = vmul.f32 %v1436, %v1447
        %v1451 = vmul.f32 %v1437, %v1449
        %s1452 = scalar_lea.vmem %s411, 64 [#allocation11]
        %v1453 = vld [vmem:[%s1452] sm:$0xff]
        %v1454 = vld [vmem:[%s1452 + $0x8] sm:$0xff]
        %v1455 = vld [vmem:[%s1452 + $0x10] sm:$0xff]
        %v1456 = vld [vmem:[%s1452 + $0x18] sm:$0xff]
        %v1457 = vld [vmem:[%s1452 + $0x20] sm:$0xff]
        %v1458 = vld [vmem:[%s1452 + $0x28] sm:$0xff]
        %v1459 = vld [vmem:[%s1452 + $0x30] sm:$0xff]
        %v1460 = vld [vmem:[%s1452 + $0x38] sm:$0xff]
        %v1462 = vsel %vm1062, %v1453, 0
        %v1465 = vsel %vm1062, %v1454, 0
        %v1468 = vsel %vm1062, %v1455, 0
        %v1471 = vsel %vm1062, %v1456, 0
        %v1474 = vsel %vm1062, %v1457, 0
        %v1477 = vsel %vm1062, %v1458, 0
        %v1480 = vsel %vm1062, %v1459, 0
        %v1483 = vsel %vm1062, %v1460, 0
        %1485 = vmatprep.subr.mxu0 0.0
        %1486 = vmatpush1.msra.mxu0 %v1450
        %1487 = vmatprep.subr.mxu0 0.0
        %1488 = vmatpush1.msra.mxu0 %v1451
        %1489 = vmatprep.subr.mxu0 0.0
        %1490 = vmatpush1.msra.mxu0 0.0
        %1491 = vmatprep.subr.mxu0 0.0
        %1492 = vmatpush1.msra.mxu0 0.0
        %1493 = vmatprep.subr.mxu0 0.0
        %1494 = vmatpush1.msra.mxu0 0.0
        %1495 = vmatprep.subr.mxu0 0.0
        %1496 = vmatpush1.msra.mxu0 0.0
        %1497 = vmatprep.subr.mxu0 0.0
        %1498 = vmatpush1.msra.mxu0 0.0
        %1499 = vmatprep.subr.mxu0 0.0
        %1500 = vmatpush1.msra.mxu0 0.0
        %1501 = vmatprep.subr.mxu0 0.0
        %1502 = vmatpush1.msra.mxu0 0.0
        %1503 = vmatprep.subr.mxu0 0.0
        %1504 = vmatpush1.msra.mxu0 0.0
        %1505 = vmatprep.subr.mxu0 0.0
        %1506 = vmatpush1.msra.mxu0 0.0
        %1507 = vmatprep.subr.mxu0 0.0
        %1508 = vmatpush1.msra.mxu0 0.0
        %1509 = vmatprep.subr.mxu0 0.0
        %1510 = vmatpush1.msra.mxu0 0.0
        %1511 = vmatprep.subr.mxu0 0.0
        %1512 = vmatpush1.msra.mxu0 0.0
        %1513 = vmatprep.subr.mxu0 0.0
        %1514 = vmatpush1.msra.mxu0 0.0
        %1515 = vmatprep.subr.mxu0 0.0
        %1516 = vmatpush1.msra.mxu0 0.0
        %1517 = vmatprep.subr.mxu0 0.0
        %1518 = vmatpush1.msra.mxu0 0.0
        %1519 = vmatprep.subr.mxu0 0.0
        %1520 = vmatpush1.msra.mxu0 0.0
        %1521 = vmatprep.subr.mxu0 0.0
        %1522 = vmatpush1.msra.mxu0 0.0
        %1523 = vmatprep.subr.mxu0 0.0
        %1524 = vmatpush1.msra.mxu0 0.0
        %1525 = vmatprep.subr.mxu0 0.0
        %1526 = vmatpush1.msra.mxu0 0.0
        %1527 = vmatprep.subr.mxu0 0.0
        %1528 = vmatpush1.msra.mxu0 0.0
        %1529 = vmatprep.subr.mxu0 0.0
        %1530 = vmatpush1.msra.mxu0 0.0
        %1531 = vmatprep.subr.mxu0 0.0
        %1532 = vmatpush1.msra.mxu0 0.0
        %1533 = vmatprep.subr.mxu0 0.0
        %1534 = vmatpush1.msra.mxu0 0.0
        %1535 = vmatprep.subr.mxu0 0.0
        %1536 = vmatpush1.msra.mxu0 0.0
        %1537 = vmatprep.subr.mxu0 0.0
        %1538 = vmatpush1.msra.mxu0 0.0
        %1539 = vmatprep.subr.mxu0 0.0
        %1540 = vmatpush1.msra.mxu0 0.0
        %1541 = vmatprep.subr.mxu0 0.0
        %1542 = vmatpush1.msra.mxu0 0.0
        %1543 = vmatprep.subr.mxu0 0.0
        %1544 = vmatpush1.msra.mxu0 0.0
        %1545 = vmatprep.subr.mxu0 0.0
        %1546 = vmatpush1.msra.mxu0 0.0
        %1547 = vmatprep.subr.mxu0 0.0
        %1548 = vmatpush1.msra.mxu0 0.0
        %1549 = vmatprep.mubr.f32.mxu0 0.0
        %1550 = vmatmul.mubr.f32.gmra.mrb[0].mxu0 %v1462
        %v1551 = vpop.f32.mrb[0].mxu0
        %v1552 = vadd.f32 0.0, %v1551
        %v1553 = vpop.f32.mrb[0].mxu0
        %1554 = vmatprep.mubr.f32.mxu0 0.0
        %1555 = vmatmul.mubr.f32.gmra.mrb[0].mxu0 %v1465
        %v1556 = vpop.f32.mrb[0].mxu0
        %v1557 = vadd.f32 0.0, %v1556
        %v1558 = vpop.f32.mrb[0].mxu0
        %1559 = vmatprep.mubr.f32.mxu0 0.0
        %1560 = vmatmul.mubr.f32.gmra.mrb[0].mxu0 %v1468
        %v1561 = vpop.f32.mrb[0].mxu0
        %v1562 = vadd.f32 0.0, %v1561
        %v1563 = vpop.f32.mrb[0].mxu0
        %1564 = vmatprep.mubr.f32.mxu0 0.0
        %1565 = vmatmul.mubr.f32.gmra.mrb[0].mxu0 %v1471
        %v1566 = vpop.f32.mrb[0].mxu0
        %v1567 = vadd.f32 0.0, %v1566
        %v1568 = vpop.f32.mrb[0].mxu0
        %1569 = vmatprep.mubr.f32.mxu0 0.0
        %1570 = vmatmul.mubr.f32.gmra.mrb[0].mxu0 %v1474
        %v1571 = vpop.f32.mrb[0].mxu0
        %v1572 = vadd.f32 0.0, %v1571
        %v1573 = vpop.f32.mrb[0].mxu0
        %1574 = vmatprep.mubr.f32.mxu0 0.0
        %1575 = vmatmul.mubr.f32.gmra.mrb[0].mxu0 %v1477
        %v1576 = vpop.f32.mrb[0].mxu0
        %v1577 = vadd.f32 0.0, %v1576
        %v1578 = vpop.f32.mrb[0].mxu0
        %1579 = vmatprep.mubr.f32.mxu0 0.0
        %1580 = vmatmul.mubr.f32.gmra.mrb[0].mxu0 %v1480
        %v1581 = vpop.f32.mrb[0].mxu0
        %v1582 = vadd.f32 0.0, %v1581
        %v1583 = vpop.f32.mrb[0].mxu0
        %1584 = vmatprep.mubr.f32.mxu0 0.0
        %1585 = vmatmul.mubr.f32.gmra.mrb[0].mxu0 %v1483
        %v1586 = vpop.f32.mrb[0].mxu0
        %v1587 = vadd.f32 0.0, %v1586
        %v1588 = vpop.f32.mrb[0].mxu0
        %1589 = vdwg.mxu0
        %v1590 = vld [vmem:[#allocation3] sm:$0xff]
        %v1591 = vld [vmem:[#allocation3 + $0x8] sm:$0xff]
        %v1592 = vld [vmem:[#allocation3 + $0x10] sm:$0xff]
        %v1593 = vld [vmem:[#allocation3 + $0x18] sm:$0xff]
        %v1594 = vadd.f32 %v1590, %v1552
        %v1595 = vadd.f32 %v1591, %v1557
        %v1596 = vadd.f32 %v1592, %v1562
        %v1597 = vadd.f32 %v1593, %v1567
        %1598 = vst [vmem:[#allocation3] sm:$0xff] %v1594
        %1599 = vst [vmem:[#allocation3 + $0x8] sm:$0xff] %v1595
        %1600 = vst [vmem:[#allocation3 + $0x10] sm:$0xff] %v1596
        %1601 = vst [vmem:[#allocation3 + $0x18] sm:$0xff] %v1597
        %v1602 = vld [vmem:[#allocation2 + $0x8] sm:$0xff]
        %v1603 = vld [vmem:[#allocation2 + $0x20] sm:$0xff]
        %v1604 = vld [vmem:[#allocation2 + $0x38] sm:$0xff]
        %v1605 = vld [vmem:[#allocation2 + $0x50] sm:$0xff]
        %v1606 = vadd.f32 %v1572, %v1602
        %v1607 = vadd.f32 %v1577, %v1603
        %v1608 = vadd.f32 %v1582, %v1604
        %v1609 = vadd.f32 %v1587, %v1605
        %v1610 = vmul.f32 %v1606, 0.70710677
        %v1611 = vmul.f32 %v1607, 0.70710677
        %v1612 = vmul.f32 %v1608, 0.70710677
        %v1613 = vmul.f32 %v1609, 0.70710677
        %1614 = vst [vmem:[#allocation2 + $0x8] sm:$0xff] %v1610
        %1615 = vst [vmem:[#allocation2 + $0x20] sm:$0xff] %v1611
        %1616 = vst [vmem:[#allocation2 + $0x38] sm:$0xff] %v1612
        %1617 = vst [vmem:[#allocation2 + $0x50] sm:$0xff] %v1613
        %p1618 = scmp.eq.s32.totalorder %s34, 1
        // Predicated region
        $region85: #{tpu_custom_call.1} parent=51 // pred_check
          %p1619 = pneg %p1618
        $region86: #{tpu_custom_call.1} parent=51 // pred_check_branch
          %1621 = sbr.rel (%p1619) target = $region88
        $region87: #{tpu_custom_call.1} parent=51 // pred_region
          %v1622 = vld [vmem:[#allocation3] sm:$0xff]
          %v1623 = vld [vmem:[#allocation3 + $0x8] sm:$0xff]
          %v1624 = vld [vmem:[#allocation3 + $0x10] sm:$0xff]
          %v1625 = vld [vmem:[#allocation3 + $0x18] sm:$0xff]
          %v1626 = vmul.f32 %v1622, 0.5
          %v1627 = vmul.f32 %v1623, 0.5
          %v1628 = vmul.f32 %v1624, 0.5
          %v1629 = vmul.f32 %v1625, 0.5
          %v1630 = vmax.f32 %v1626, 0.0
          %v1631 = vmax.f32 %v1627, 0.0
          %v1632 = vmax.f32 %v1628, 0.0
          %v1633 = vmax.f32 %v1629, 0.0
          %v1634 = vld [vmem:[#allocation12] sm:$0xff]
          %v1635 = vld [vmem:[#allocation12 + $0x8] sm:$0xff]
          %v1636 = vld [vmem:[#allocation12 + $0x10] sm:$0xff]
          %v1637 = vld [vmem:[#allocation12 + $0x18] sm:$0xff]
          %v1638 = vld [vmem:[#allocation13] sm:$0xff]
          %v1639 = vld [vmem:[#allocation13 + $0x8] sm:$0xff]
          %v1640 = vld [vmem:[#allocation13 + $0x10] sm:$0xff]
          %v1641 = vld [vmem:[#allocation13 + $0x18] sm:$0xff]
          %1643 = vset.pattern.permute.xlu0 0
          %1644 = vperm.xlu0 %1643, %v1638
          %v1645 = vpop.permute.xlu0 %1644
          %1648 = vset.pattern.permute.xlu0 0
          %1649 = vperm.xlu0 %1648, %v1639
          %v1650 = vpop.permute.xlu0 %1649
          %1653 = vset.pattern.permute.xlu0 0
          %1654 = vperm.xlu0 %1653, %v1640
          %v1655 = vpop.permute.xlu0 %1654
          %1658 = vset.pattern.permute.xlu0 0
          %1659 = vperm.xlu0 %1658, %v1641
          %v1660 = vpop.permute.xlu0 %1659
          %vm1662 = vcmask 261120
          %v1664 = vsel %vm1662, %v1634, 0
          %v1667 = vsel %vm1662, %v1635, 0
          %v1670 = vsel %vm1662, %v1636, 0
          %v1673 = vsel %vm1662, %v1637, 0
          %1675 = vmatprep.subr.mxu0 0.0
          %1676 = vmatpush1.msra.mxu0 %v1630
          %1677 = vmatprep.subr.mxu0 0.0
          %1678 = vmatpush1.msra.mxu0 %v1631
          %1679 = vmatprep.subr.mxu0 0.0
          %1680 = vmatpush1.msra.mxu0 %v1632
          %1681 = vmatprep.subr.mxu0 0.0
          %1682 = vmatpush1.msra.mxu0 %v1633
          %1683 = vmatprep.subr.mxu0 0.0
          %1684 = vmatpush1.msra.mxu0 0.0
          %1685 = vmatprep.subr.mxu0 0.0
          %1686 = vmatpush1.msra.mxu0 0.0
          %1687 = vmatprep.subr.mxu0 0.0
          %1688 = vmatpush1.msra.mxu0 0.0
          %1689 = vmatprep.subr.mxu0 0.0
          %1690 = vmatpush1.msra.mxu0 0.0
          %1691 = vmatprep.subr.mxu0 0.0
          %1692 = vmatpush1.msra.mxu0 0.0
          %1693 = vmatprep.subr.mxu0 0.0
          %1694 = vmatpush1.msra.mxu0 0.0
          %1695 = vmatprep.subr.mxu0 0.0
          %1696 = vmatpush1.msra.mxu0 0.0
          %1697 = vmatprep.subr.mxu0 0.0
          %1698 = vmatpush1.msra.mxu0 0.0
          %1699 = vmatprep.subr.mxu0 0.0
          %1700 = vmatpush1.msra.mxu0 0.0
          %1701 = vmatprep.subr.mxu0 0.0
          %1702 = vmatpush1.msra.mxu0 0.0
          %1703 = vmatprep.subr.mxu0 0.0
          %1704 = vmatpush1.msra.mxu0 0.0
          %1705 = vmatprep.subr.mxu0 0.0
          %1706 = vmatpush1.msra.mxu0 0.0
          %1707 = vmatprep.subr.mxu0 0.0
          %1708 = vmatpush1.msra.mxu0 0.0
          %1709 = vmatprep.subr.mxu0 0.0
          %1710 = vmatpush1.msra.mxu0 0.0
          %1711 = vmatprep.subr.mxu0 0.0
          %1712 = vmatpush1.msra.mxu0 0.0
          %1713 = vmatprep.subr.mxu0 0.0
          %1714 = vmatpush1.msra.mxu0 0.0
          %1715 = vmatprep.subr.mxu0 0.0
          %1716 = vmatpush1.msra.mxu0 0.0
          %1717 = vmatprep.subr.mxu0 0.0
          %1718 = vmatpush1.msra.mxu0 0.0
          %1719 = vmatprep.subr.mxu0 0.0
          %1720 = vmatpush1.msra.mxu0 0.0
          %1721 = vmatprep.subr.mxu0 0.0
          %1722 = vmatpush1.msra.mxu0 0.0
          %1723 = vmatprep.subr.mxu0 0.0
          %1724 = vmatpush1.msra.mxu0 0.0
          %1725 = vmatprep.subr.mxu0 0.0
          %1726 = vmatpush1.msra.mxu0 0.0
          %1727 = vmatprep.subr.mxu0 0.0
          %1728 = vmatpush1.msra.mxu0 0.0
          %1729 = vmatprep.subr.mxu0 0.0
          %1730 = vmatpush1.msra.mxu0 0.0
          %1731 = vmatprep.subr.mxu0 0.0
          %1732 = vmatpush1.msra.mxu0 0.0
          %1733 = vmatprep.subr.mxu0 0.0
          %1734 = vmatpush1.msra.mxu0 0.0
          %1735 = vmatprep.subr.mxu0 0.0
          %1736 = vmatpush1.msra.mxu0 0.0
          %1737 = vmatprep.subr.mxu0 0.0
          %1738 = vmatpush1.msra.mxu0 0.0
          %1739 = vmatprep.mubr.f32.mxu0 0.0
          %1740 = vmatmul.mubr.f32.gmra.mrb[0].mxu0 %v1664
          %v1741 = vpop.f32.mrb[0].mxu0
          %v1742 = vadd.f32 %v1645, %v1741
          %v1743 = vpop.f32.mrb[0].mxu0
          %1744 = vmatprep.mubr.f32.mxu0 0.0
          %1745 = vmatmul.mubr.f32.gmra.mrb[0].mxu0 %v1667
          %v1746 = vpop.f32.mrb[0].mxu0
          %v1747 = vadd.f32 %v1650, %v1746
          %v1748 = vpop.f32.mrb[0].mxu0
          %1749 = vmatprep.mubr.f32.mxu0 0.0
          %1750 = vmatmul.mubr.f32.gmra.mrb[0].mxu0 %v1670
          %v1751 = vpop.f32.mrb[0].mxu0
          %v1752 = vadd.f32 %v1655, %v1751
          %v1753 = vpop.f32.mrb[0].mxu0
          %1754 = vmatprep.mubr.f32.mxu0 0.0
          %1755 = vmatmul.mubr.f32.gmra.mrb[0].mxu0 %v1673
          %v1756 = vpop.f32.mrb[0].mxu0
          %v1757 = vadd.f32 %v1660, %v1756
          %v1758 = vpop.f32.mrb[0].mxu0
          %1759 = vdwg.mxu0
          %v1760 = vmax.f32 %v1742, 0.0
          %v1761 = vmax.f32 %v1747, 0.0
          %v1762 = vmax.f32 %v1752, 0.0
          %v1763 = vmax.f32 %v1757, 0.0
          %v1764 = vld [vmem:[#allocation15] sm:$0x1]
          %v1765 = vld [vmem:[#allocation4] sm:$0x1]
          %1767 = vset.pattern.permute.xlu0 0
          %1768 = vperm.xlu0 %1767, %v1765
          %v1769 = vpop.permute.xlu0 %1768
          %v1771 = vlaneseq
          %v1772 = vshrl.u32 %v1771, 7
          %v1773 = vsub.s32 0, %v1772
          %v1774 = vrot.slane %v1769, %v1773
          %v1776 = vsel %vm1662, %v1764, 0
          %1778 = vmatprep.subr.mxu0 0.0
          %1779 = vmatpush1.msra.mxu0 %v1760
          %1780 = vmatprep.subr.mxu0 0.0
          %1781 = vmatpush1.msra.mxu0 %v1761
          %1782 = vmatprep.subr.mxu0 0.0
          %1783 = vmatpush1.msra.mxu0 %v1762
          %1784 = vmatprep.subr.mxu0 0.0
          %1785 = vmatpush1.msra.mxu0 %v1763
          %1786 = vmatprep.subr.mxu0 0.0
          %1787 = vmatpush1.msra.mxu0 0.0
          %1788 = vmatprep.subr.mxu0 0.0
          %1789 = vmatpush1.msra.mxu0 0.0
          %1790 = vmatprep.subr.mxu0 0.0
          %1791 = vmatpush1.msra.mxu0 0.0
          %1792 = vmatprep.subr.mxu0 0.0
          %1793 = vmatpush1.msra.mxu0 0.0
          %1794 = vmatprep.subr.mxu0 0.0
          %1795 = vmatpush1.msra.mxu0 0.0
          %1796 = vmatprep.subr.mxu0 0.0
          %1797 = vmatpush1.msra.mxu0 0.0
          %1798 = vmatprep.subr.mxu0 0.0
          %1799 = vmatpush1.msra.mxu0 0.0
          %1800 = vmatprep.subr.mxu0 0.0
          %1801 = vmatpush1.msra.mxu0 0.0
          %1802 = vmatprep.subr.mxu0 0.0
          %1803 = vmatpush1.msra.mxu0 0.0
          %1804 = vmatprep.subr.mxu0 0.0
          %1805 = vmatpush1.msra.mxu0 0.0
          %1806 = vmatprep.subr.mxu0 0.0
          %1807 = vmatpush1.msra.mxu0 0.0
          %1808 = vmatprep.subr.mxu0 0.0
          %1809 = vmatpush1.msra.mxu0 0.0
          %1810 = vmatprep.subr.mxu0 0.0
          %1811 = vmatpush1.msra.mxu0 0.0
          %1812 = vmatprep.subr.mxu0 0.0
          %1813 = vmatpush1.msra.mxu0 0.0
          %1814 = vmatprep.subr.mxu0 0.0
          %1815 = vmatpush1.msra.mxu0 0.0
          %1816 = vmatprep.subr.mxu0 0.0
          %1817 = vmatpush1.msra.mxu0 0.0
          %1818 = vmatprep.subr.mxu0 0.0
          %1819 = vmatpush1.msra.mxu0 0.0
          %1820 = vmatprep.subr.mxu0 0.0
          %1821 = vmatpush1.msra.mxu0 0.0
          %1822 = vmatprep.subr.mxu0 0.0
          %1823 = vmatpush1.msra.mxu0 0.0
          %1824 = vmatprep.subr.mxu0 0.0
          %1825 = vmatpush1.msra.mxu0 0.0
          %1826 = vmatprep.subr.mxu0 0.0
          %1827 = vmatpush1.msra.mxu0 0.0
          %1828 = vmatprep.subr.mxu0 0.0
          %1829 = vmatpush1.msra.mxu0 0.0
          %1830 = vmatprep.subr.mxu0 0.0
          %1831 = vmatpush1.msra.mxu0 0.0
          %1832 = vmatprep.subr.mxu0 0.0
          %1833 = vmatpush1.msra.mxu0 0.0
          %1834 = vmatprep.subr.mxu0 0.0
          %1835 = vmatpush1.msra.mxu0 0.0
          %1836 = vmatprep.subr.mxu0 0.0
          %1837 = vmatpush1.msra.mxu0 0.0
          %1838 = vmatprep.subr.mxu0 0.0
          %1839 = vmatpush1.msra.mxu0 0.0
          %1840 = vmatprep.subr.mxu0 0.0
          %1841 = vmatpush1.msra.mxu0 0.0
          %1842 = vmatprep.mubr.f32.mxu0 0.0
          %1843 = vmatmul.mubr.f32.gmra.mrb[0].mxu0 %v1776
          %v1844 = vpop.f32.mrb[0].mxu0
          %v1845 = vadd.f32 %v1774, %v1844
          %v1846 = vpop.f32.mrb[0].mxu0
          %1847 = vdwg.mxu0
          %1848 = vst [vmem:[%s464] sm:$0x1] %v1845
        $region88: #{tpu_custom_call.1} parent=51 // pred_fallthru
          _
        %s1849 = sand.u32 %s232, 1
        %s1850 = scalar_lea.sflag [#allocation7], %s1849
        %s1851 = sand.u32 %s232, 1
        %s1852 = scalar_lea.vmem [#allocation16], %s1851
        // Predicated region
        $region89: #{tpu_custom_call.1} parent=51 // pred_check
          %p1853 = pneg %p242
        $region90: #{tpu_custom_call.1} parent=51 // pred_check_branch
          %1855 = sbr.rel (%p1853) target = $region92
        $region91: #{tpu_custom_call.1} parent=51 // pred_region
          %s1857 = ssub.s32 16, 16
          %1858 = vsyncadd %s1850, %s1857
          %s1859 = smul.addr %s33, 16
          %s1860 = scalar_lea.hbm %s8, %s1859
          %s1862 = sshll.u32 %s1852, 4
          %s1863 = int_to_ptr.vmem [resolvable:$true] %s1862
          %1865 = dma.vmem_to_hbm [thread:$0]  %s1863, 16, %s1860, %s1850
        $region92: #{tpu_custom_call.1} parent=51 // pred_fallthru
          _
      $region52: #{tpu_custom_call.1} parent=5 // pred_fallthru
        _
      %p1866 = scmp.le.s32.totalorder 2, %s24
      // Predicated region
      $region93: #{tpu_custom_call.1} parent=5 // pred_check
        %p1867 = pneg %p1866
      $region94: #{tpu_custom_call.1} parent=5 // pred_check_branch
        %1869 = sbr.rel (%p1867) target = $region96
      $region95: #{tpu_custom_call.1} parent=5 // pred_region
        %s1870 = ssub.s32 %s24, 2
        // Predicated region
        $region97: #{tpu_custom_call.1} parent=95 // pred_check
          %p1871 = pneg %p248
        $region98: #{tpu_custom_call.1} parent=95 // pred_check_branch
          %1873 = sbr.rel (%p1871) target = $region100
        $region99: #{tpu_custom_call.1} parent=95 // pred_region
          %s1874 = sand.u32 %s233, 1
          %s1875 = scalar_lea.sflag [#allocation7], %s1874
          %s1876 = sand.u32 %s233, 1
          %s1877 = scalar_lea.vmem [#allocation16], %s1876
          %1878 = dma.done %s1875, 16
        $region100: #{tpu_custom_call.1} parent=95 // pred_fallthru
          _
      $region96: #{tpu_custom_call.1} parent=5 // pred_fallthru
        _
    $region6: #{tpu_custom_call.1} parent=1 // loop_footer
      %s28 = sadd.s32 1, %s24
    $region7: #{tpu_custom_call.1} parent=1 // loop_footer_branch
      %23 = sbr.rel target = $region3
    $region8: #{tpu_custom_call.1} parent=1 // loop_exit
      _
    %1879 = vsyncpa [#allocation6], 1
    %s1880 = scalar_lea.sflag [#allocation6], 1
    %1881 = vsyncpa %s1880, 1
    %1882 = vsyncpa [#allocation9], 1
    %1883 = vsyncpa [#allocation14], 1
    %1884 = vsyncpa [#allocation7], 1
    %s1885 = scalar_lea.sflag [#allocation7], 1
    %1886 = vsyncpa %s1885, 1

</llo_original>
